<compile_context>
chip_gen: v6e
topology: v6e:2x2x1
jax: 0.10.0
libtpu: 0.0.40
codegen_flags: <defaults>
</compile_context>

<pallas_src>
import jax
import jax.numpy as jnp
from jax import lax
from jax.experimental import pallas as pl
from jax.experimental.pallas import tpu as pltpu

MATMUL_DTYPE = jnp.bfloat16   # MXU operand dtype (accumulation is always f32)
LANE = 128                    # vreg lane width  -> per-gate hidden padding
SUBLANE = 8                   # vreg sublane width -> batch padding
T_BLK = 8                     # timesteps per grid step (fully unrolled in-kernel)


def _round_up(x, m):
    return ((x + m - 1) // m) * m


def _pad_gate_cols(w, H, Hp):
    """Zero-pad the trailing 4H gate axis to 4Hp so every gate spans whole lane tiles."""
    lead = w.shape[:-1]
    w = w.reshape(lead + (4, H))
    pad = [(0, 0)] * len(lead) + [(0, 0), (0, Hp - H)]
    return jnp.pad(w, pad).reshape(lead + (4 * Hp,))


# ---------------------------------------------------------------------------
# Fused kernel: input projection + LSTM recurrence + last-step gather +
# projection + sigmoid
# ---------------------------------------------------------------------------
def _lstm_fused_kernel(lens_ref, x_ref, wih_ref, whh_ref, b_ref, wp_ref, bp_ref,
                       out_ref, h_ref, c_ref, last_ref, xg_ref):
    t_block = pl.program_id(1)                 # time-block index ("arbitrary" axis)
    TBLK, TB, _E = x_ref.shape                 # (timesteps per block, batch tile, emb)
    Hp = h_ref.shape[1]

    @pl.when(t_block == 0)
    def _():                                   # init_hidden(): zeros
        h_ref[...] = jnp.zeros_like(h_ref)
        c_ref[...] = jnp.zeros_like(c_ref)
        last_ref[...] = jnp.zeros_like(last_ref)

    # Hoisted input projection for the whole time block (single MXU pass):
    #   (TBLK*TB, E) @ (E, 4Hp) + (b_ih + b_hh)
    x = x_ref[...].reshape(TBLK * TB, -1).astype(wih_ref.dtype)
    xg = jnp.dot(x, wih_ref[...], preferred_element_type=jnp.float32) + b_ref[...]
    xg_ref[...] = xg.reshape(TBLK, TB, 4 * Hp)

    lens = lens_ref[...]                       # (TB, 1) int32, holds seq_len - 1

    def step(t, carry):
        h, c, last = carry
        gates = xg_ref[t] + jnp.dot(h.astype(whh_ref.dtype), whh_ref[...],
                                    preferred_element_type=jnp.float32)
        # PyTorch gate order i, f, g, o; Hp is a multiple of 128 so every slice is
        # aligned to whole 128-lane vreg tiles.
        i_g = jax.nn.sigmoid(gates[:, 0 * Hp:1 * Hp])
        f_g = jax.nn.sigmoid(gates[:, 1 * Hp:2 * Hp])
        g_g = jnp.tanh(gates[:, 2 * Hp:3 * Hp])
        o_g = jax.nn.sigmoid(gates[:, 3 * Hp:4 * Hp])
        c_new = f_g * c + i_g * g_g
        h_new = o_g * jnp.tanh(c_new)
        # Packed-sequence semantics: keep h at global t == seq_len - 1.
        take = lens == (t_block * TBLK + t)
        last_new = jnp.where(take, h_new, last)
        return h_new, c_new, last_new

    h, c, last = lax.fori_loop(0, TBLK, step,
                               (h_ref[...], c_ref[...], last_ref[...]),
                               unroll=True)
    h_ref[...] = h
    c_ref[...] = c
    last_ref[...] = last

    @pl.when(t_block == pl.num_programs(1) - 1)
    def _():                                   # fused projection + sigmoid
        logits = jnp.dot(last.astype(wp_ref.dtype), wp_ref[...],
                         preferred_element_type=jnp.float32) + bp_ref[...]
        out_ref[...] = jax.nn.sigmoid(logits).astype(out_ref.dtype)


def _fused_lstm_head(emb, lens_m1, w_ih, w_hh, b, w_proj, b_proj, *, num_batch_tiles):
    """emb:(Tp,Bp,E) f32, lens_m1:(Bp,1) i32, w_ih:(E,4Hp), w_hh:(Hp,4Hp),
    b:(1,4Hp) f32, w_proj:(Hp,P), b_proj:(1,P) f32  ->  sigmoid head (Bp,P) f32."""
    Tp, Bp, E = emb.shape
    Hp = w_hh.shape[0]
    P = w_proj.shape[1]
    nb = num_batch_tiles
    TB = Bp // nb
    nt = Tp // T_BLK

    # Explicit VMEM budget (v7x has only 64 MiB physical / 32 MiB default scoped).
    mdt = jnp.dtype(MATMUL_DTYPE).itemsize
    resident = (E * 4 * Hp + Hp * 4 * Hp + Hp * P) * mdt + (4 * Hp + P) * 4
    streamed = 2 * (T_BLK * TB * E * 4 + TB * 4 + TB * P * 4)      # double buffered
    scratch = (3 * TB * Hp + T_BLK * TB * 4 * Hp) * 4
    vmem_limit = int(min(48 * 2**20,
                         max(16 * 2**20, 2 * (resident + streamed + scratch))))

    return pl.pallas_call(
        _lstm_fused_kernel,
        out_shape=jax.ShapeDtypeStruct((Bp, P), jnp.float32),
        grid_spec=pltpu.PrefetchScalarGridSpec(
            num_scalar_prefetch=0,
            grid=(nb, nt),
            in_specs=[
                pl.BlockSpec((TB, 1), lambda bt, tt: (bt, 0)),           # seq_len - 1
                pl.BlockSpec((T_BLK, TB, E), lambda bt, tt: (tt, bt, 0)),  # embedded x
                pl.BlockSpec((E, 4 * Hp), lambda bt, tt: (0, 0)),        # W_ih^T (resident)
                pl.BlockSpec((Hp, 4 * Hp), lambda bt, tt: (0, 0)),       # W_hh^T (resident)
                pl.BlockSpec((1, 4 * Hp), lambda bt, tt: (0, 0)),        # b_ih + b_hh
                pl.BlockSpec((Hp, P), lambda bt, tt: (0, 0)),            # projection weight
                pl.BlockSpec((1, P), lambda bt, tt: (0, 0)),             # projection bias
            ],
            out_specs=pl.BlockSpec((TB, P), lambda bt, tt: (bt, 0)),
            scratch_shapes=[
                pltpu.VMEM((TB, Hp), jnp.float32),             # h
                pltpu.VMEM((TB, Hp), jnp.float32),             # c
                pltpu.VMEM((TB, Hp), jnp.float32),             # last valid h
                pltpu.VMEM((T_BLK, TB, 4 * Hp), jnp.float32),  # block input gates
            ],
        ),
        compiler_params=pltpu.CompilerParams(
            dimension_semantics=("parallel", "arbitrary"),   # batch || , time is a recurrence
            vmem_limit_bytes=vmem_limit,
        ),
    )(lens_m1, emb, w_ih, w_hh, b, w_proj, b_proj)


# ---------------------------------------------------------------------------
# Forward pass mirroring ReportAnalysis.forward
# ---------------------------------------------------------------------------
def report_analysis_forward(params, reports, seq_lens):
    """reports: (T, B, 1) int32 token ids; seq_lens: (B,) valid lengths, 1 <= len <= T.
    (seq_len == 0 or > T would make PyTorch's pack_padded_sequence error; here such rows
    would simply return sigmoid(b_proj) — inputs are assumed validated by the caller.)"""
    T, B, _ = reports.shape
    E = params["emb"].shape[1]
    H = params["w_hh"].shape[0]
    P = params["w_proj"].shape[1]

    Hp = _round_up(H, LANE)                       # lane-aligned per-gate hidden size
    if B <= SUBLANE:
        Bp, nb = SUBLANE, 1
    else:
        nb = 2                                    # 2 batch tiles -> both v7x TensorCores
        Bp = _round_up(B, nb * SUBLANE)
    Tp = _round_up(T, T_BLK)

    # Embedding lookup stays in plain JAX.
    # TODO(synk): embedding row gather is not lowered to Pallas (dynamic row gather has
    # no cheap BlockSpec form at these sizes); everything dense runs in the fused kernel.
    emb = jnp.take(params["emb"], reports[:, :, 0], axis=0)            # (T, B, E) f32
    emb = jnp.pad(emb, ((0, Tp - T), (0, Bp - B), (0, 0)))

    # t == seq_len - 1 selects the last valid timestep (pack_padded_sequence semantics).
    lens_m1 = seq_lens.astype(jnp.int32) - 1
    lens_m1 = jnp.pad(lens_m1, (0, Bp - B), constant_values=-1).reshape(Bp, 1)

    # Zero-pad each gate's hidden slice to Hp (lane aligned) and cast MXU operands.
    # Zero padding keeps the recurrence exact: padded h lanes stay exactly 0.
    w_ih = _pad_gate_cols(params["w_ih"], H, Hp).astype(MATMUL_DTYPE)               # (E, 4Hp)
    w_hh = _pad_gate_cols(params["w_hh"], H, Hp)                                    # (H, 4Hp)
    w_hh = jnp.pad(w_hh, ((0, Hp - H), (0, 0))).astype(MATMUL_DTYPE)                # (Hp, 4Hp)
    b = _pad_gate_cols(params["b"], H, Hp).reshape(1, 4 * Hp)                       # f32
    w_proj = jnp.pad(params["w_proj"], ((0, Hp - H), (0, 0))).astype(MATMUL_DTYPE)  # (Hp, P)
    b_proj = params["b_proj"].reshape(1, P)                                         # f32

    out = _fused_lstm_head(emb, lens_m1, w_ih, w_hh, b, w_proj, b_proj,
                           num_batch_tiles=nb)
    return out[:B]


# ---------------------------------------------------------------------------
# Deterministic parameter init (matches the PyTorch module's init conventions)
# ---------------------------------------------------------------------------
def init_params(key, vocab_size, embedding_dim, hidden_dim, label_size=1):
    k_emb, k_wih, k_whh, k_bih, k_bhh, k_proj = jax.random.split(key, 6)
    E, H = embedding_dim, hidden_dim
    s = 1.0 / float(H) ** 0.5
    emb = jax.random.normal(k_emb, (vocab_size + 1, E), jnp.float32)       # nn.Embedding default
    w_ih = jax.random.uniform(k_wih, (E, 4 * H), jnp.float32, -s, s)       # stored transposed
    w_hh = jax.random.uniform(k_whh, (H, 4 * H), jnp.float32, -s, s)
    b_ih = jax.random.uniform(k_bih, (4 * H,), jnp.float32, -s, s)
    b_hh = jax.random.uniform(k_bhh, (4 * H,), jnp.float32, -s, s)
    w_proj = jax.random.uniform(k_proj, (H, label_size), jnp.float32, -0.1, 0.1)
    b_proj = jnp.full((label_size,), 0.635, jnp.float32)                   # init_weights(): class prior
    return {
        "emb": emb,
        "w_ih": w_ih,
        "w_hh": w_hh,
        "b": b_ih + b_hh,      # folded LSTM biases
        "w_proj": w_proj,
        "b_proj": b_proj,
    }


if __name__ == "__main__":
    key = jax.random.PRNGKey(0)
    vocab_size, embedding_dim, hidden_dim = 50, 32, 32
    batch_size, seq_len, label_size = 2, 8, 1

    pkey, rkey = jax.random.split(key)
    params = init_params(pkey, vocab_size, embedding_dim, hidden_dim, label_size)

    # (T, B, 1) token ids and descending seq_lens (pack_padded_sequence convention).
    reports = jax.random.randint(rkey, (seq_len, batch_size, 1), 1, vocab_size + 1,
                                 dtype=jnp.int32)
    seq_lens = jnp.array([8, 5], dtype=jnp.int32)
    assert int(seq_lens.min()) >= 1 and int(seq_lens.max()) <= seq_len

    fwd = jax.jit(report_analysis_forward)
    out = jax.block_until_ready(fwd(params, reports, seq_lens))

    assert out.shape == (batch_size, label_size) and out.dtype == jnp.float32
    assert bool(jnp.all((out >= 0.0) & (out <= 1.0)))   # sigmoid output
    print("KERNEL_OK")
</pallas_src>

<mosaic_0001>
module attributes {stable_mosaic.version = 11 : i64} {
  func.func @_lstm_fused_kernel(%arg0: i32, %arg1: i32, %arg2: memref<8x1xi32, #tpu.memory_space<vmem>>, %arg3: memref<8x8x32xf32, #tpu.memory_space<vmem>>, %arg4: memref<32x512xbf16, #tpu.memory_space<vmem>>, %arg5: memref<128x512xbf16, #tpu.memory_space<vmem>>, %arg6: memref<1x512xf32, #tpu.memory_space<vmem>>, %arg7: memref<128x1xbf16, #tpu.memory_space<vmem>>, %arg8: memref<1x1xf32, #tpu.memory_space<vmem>>, %arg9: memref<8x1xf32, #tpu.memory_space<vmem>>, %arg10: memref<8x128xf32, #tpu.memory_space<vmem>>, %arg11: memref<8x128xf32, #tpu.memory_space<vmem>>, %arg12: memref<8x128xf32, #tpu.memory_space<vmem>>, %arg13: memref<8x8x512xf32, #tpu.memory_space<vmem>>) attributes {dimension_semantics = [#tpu.dimension_semantics<parallel>, #tpu.dimension_semantics<arbitrary>], iteration_bounds = array<i64: 1, 1>, scalar_prefetch = 0 : i64, scratch_operands = 4 : i64, tpu.core_type = #tpu.core_type<tc>, window_params = [{transform_indices = @transform_0, window_bounds = array<i64: 8, 1>}, {transform_indices = @transform_1, window_bounds = array<i64: 8, 8, 32>}, {pipeline_mode = #tpu.pipeline_mode<synchronous>, transform_indices = @transform_2, window_bounds = array<i64: 32, 512>}, {pipeline_mode = #tpu.pipeline_mode<synchronous>, transform_indices = @transform_3, window_bounds = array<i64: 128, 512>}, {pipeline_mode = #tpu.pipeline_mode<synchronous>, transform_indices = @transform_4, window_bounds = array<i64: 1, 512>}, {pipeline_mode = #tpu.pipeline_mode<synchronous>, transform_indices = @transform_5, window_bounds = array<i64: 128, 1>}, {pipeline_mode = #tpu.pipeline_mode<synchronous>, transform_indices = @transform_6, window_bounds = array<i64: 1, 1>}, {transform_indices = @transform_7, window_bounds = array<i64: 8, 1>}]} {
    %c0_i32 = arith.constant 0 : i32
    %0 = arith.cmpi eq, %arg1, %c0_i32 : i32
    %1 = arith.extui %0 : i1 to i32
    %c0_i32_0 = arith.constant 0 : i32
    %2 = arith.cmpi ne, %1, %c0_i32_0 : i32
    scf.if %2 {
      %cst_99 = arith.constant 0.000000e+00 : f32
      %335 = vector.broadcast %cst_99 : f32 to vector<8x128xf32>
      %c0_100 = arith.constant 0 : index
      %c0_101 = arith.constant 0 : index
      %336 = vector.load %arg10[%c0_100, %c0_101] : memref<8x128xf32, #tpu.memory_space<vmem>>, vector<8x128xf32>
      tpu.vector_store %arg10[%c0_100, %c0_101], %335 {strides = array<i32>} : memref<8x128xf32, #tpu.memory_space<vmem>>, vector<8x128xf32>,
      %cst_102 = arith.constant 0.000000e+00 : f32
      %337 = vector.broadcast %cst_102 : f32 to vector<8x128xf32>
      %c0_103 = arith.constant 0 : index
      %c0_104 = arith.constant 0 : index
      %338 = vector.load %arg11[%c0_103, %c0_104] : memref<8x128xf32, #tpu.memory_space<vmem>>, vector<8x128xf32>
      tpu.vector_store %arg11[%c0_103, %c0_104], %337 {strides = array<i32>} : memref<8x128xf32, #tpu.memory_space<vmem>>, vector<8x128xf32>,
      %cst_105 = arith.constant 0.000000e+00 : f32
      %339 = vector.broadcast %cst_105 : f32 to vector<8x128xf32>
      %c0_106 = arith.constant 0 : index
      %c0_107 = arith.constant 0 : index
      %340 = vector.load %arg12[%c0_106, %c0_107] : memref<8x128xf32, #tpu.memory_space<vmem>>, vector<8x128xf32>
      tpu.vector_store %arg12[%c0_106, %c0_107], %339 {strides = array<i32>} : memref<8x128xf32, #tpu.memory_space<vmem>>, vector<8x128xf32>,
    } else {
    }
    %c0 = arith.constant 0 : index
    %c0_1 = arith.constant 0 : index
    %c0_2 = arith.constant 0 : index
    %3 = vector.load %arg3[%c0, %c0_1, %c0_2] : memref<8x8x32xf32, #tpu.memory_space<vmem>>, vector<8x8x32xf32>
    %4 = vector.shape_cast %3 : vector<8x8x32xf32> to vector<64x32xf32>
    %5 = arith.truncf %4 : vector<64x32xf32> to vector<64x32xbf16>
    %c0_3 = arith.constant 0 : index
    %c0_4 = arith.constant 0 : index
    %6 = vector.load %arg4[%c0_3, %c0_4] : memref<32x512xbf16, #tpu.memory_space<vmem>>, vector<32x512xbf16>
    %cst = arith.constant dense<0.000000e+00> : vector<64x512xf32>
    %7 = tpu.matmul %5, %6, %cst {dimension_numbers = #tpu.dot_dimension_numbers<[1], [0], [0], [1], [0, 0, 1, 1], [], []>} : vector<64x32xbf16>, vector<32x512xbf16>, vector<64x512xf32> -> vector<64x512xf32>
    %c0_5 = arith.constant 0 : index
    %c0_6 = arith.constant 0 : index
    %8 = vector.load %arg6[%c0_5, %c0_6] : memref<1x512xf32, #tpu.memory_space<vmem>>, vector<1x512xf32>
    %9 = vector.broadcast %8 : vector<1x512xf32> to vector<64x512xf32>
    %10 = arith.addf %7, %9 : vector<64x512xf32>
    %11 = vector.shape_cast %10 : vector<64x512xf32> to vector<8x8x512xf32>
    %c0_7 = arith.constant 0 : index
    %c0_8 = arith.constant 0 : index
    %c0_9 = arith.constant 0 : index
    %12 = vector.load %arg13[%c0_7, %c0_8, %c0_9] : memref<8x8x512xf32, #tpu.memory_space<vmem>>, vector<8x8x512xf32>
    tpu.vector_store %arg13[%c0_7, %c0_8, %c0_9], %11 {strides = array<i32>} : memref<8x8x512xf32, #tpu.memory_space<vmem>>, vector<8x8x512xf32>,
    %c0_10 = arith.constant 0 : index
    %c0_11 = arith.constant 0 : index
    %13 = vector.load %arg2[%c0_10, %c0_11] : memref<8x1xi32, #tpu.memory_space<vmem>>, vector<8x1xi32>
    %c0_12 = arith.constant 0 : index
    %c0_13 = arith.constant 0 : index
    %14 = vector.load %arg10[%c0_12, %c0_13] : memref<8x128xf32, #tpu.memory_space<vmem>>, vector<8x128xf32>
    %c0_14 = arith.constant 0 : index
    %c0_15 = arith.constant 0 : index
    %15 = vector.load %arg11[%c0_14, %c0_15] : memref<8x128xf32, #tpu.memory_space<vmem>>, vector<8x128xf32>
    %c0_16 = arith.constant 0 : index
    %c0_17 = arith.constant 0 : index
    %16 = vector.load %arg12[%c0_16, %c0_17] : memref<8x128xf32, #tpu.memory_space<vmem>>, vector<8x128xf32>
    %c0_i32_18 = arith.constant 0 : i32
    %17 = arith.index_cast %c0_i32_18 : i32 to index
    %c0_19 = arith.constant 0 : index
    %c0_20 = arith.constant 0 : index
    %18 = vector.load %arg13[%17, %c0_19, %c0_20] : memref<8x8x512xf32, #tpu.memory_space<vmem>>, vector<1x8x512xf32>
    %19 = vector.shape_cast %18 : vector<1x8x512xf32> to vector<8x512xf32>
    %20 = arith.truncf %14 : vector<8x128xf32> to vector<8x128xbf16>
    %c0_21 = arith.constant 0 : index
    %c0_22 = arith.constant 0 : index
    %21 = vector.load %arg5[%c0_21, %c0_22] : memref<128x512xbf16, #tpu.memory_space<vmem>>, vector<128x512xbf16>
    %cst_23 = arith.constant dense<0.000000e+00> : vector<8x512xf32>
    %22 = tpu.matmul %20, %21, %cst_23 {dimension_numbers = #tpu.dot_dimension_numbers<[1], [0], [0], [1], [0, 0, 1, 1], [], []>} : vector<8x128xbf16>, vector<128x512xbf16>, vector<8x512xf32> -> vector<8x512xf32>
    %23 = arith.addf %19, %22 : vector<8x512xf32>
    %24 = vector.extract_strided_slice %23 {offsets = [0, 0], sizes = [8, 128], strides = [1, 1]} : vector<8x512xf32> to vector<8x128xf32>
    %25 = arith.negf %24 : vector<8x128xf32>
    %26 = math.exp %25 : vector<8x128xf32>
    %cst_24 = arith.constant 1.000000e+00 : f32
    %27 = vector.broadcast %cst_24 : f32 to vector<8x128xf32>
    %28 = arith.addf %27, %26 : vector<8x128xf32>
    %29 = arith.divf %27, %28 : vector<8x128xf32>
    %30 = vector.extract_strided_slice %23 {offsets = [0, 128], sizes = [8, 128], strides = [1, 1]} : vector<8x512xf32> to vector<8x128xf32>
    %31 = arith.negf %30 : vector<8x128xf32>
    %32 = math.exp %31 : vector<8x128xf32>
    %cst_25 = arith.constant 1.000000e+00 : f32
    %33 = vector.broadcast %cst_25 : f32 to vector<8x128xf32>
    %34 = arith.addf %33, %32 : vector<8x128xf32>
    %35 = arith.divf %33, %34 : vector<8x128xf32>
    %36 = vector.extract_strided_slice %23 {offsets = [0, 256], sizes = [8, 128], strides = [1, 1]} : vector<8x512xf32> to vector<8x128xf32>
    %37 = math.tanh %36 : vector<8x128xf32>
    %38 = vector.extract_strided_slice %23 {offsets = [0, 384], sizes = [8, 128], strides = [1, 1]} : vector<8x512xf32> to vector<8x128xf32>
    %39 = arith.negf %38 : vector<8x128xf32>
    %40 = math.exp %39 : vector<8x128xf32>
    %cst_26 = arith.constant 1.000000e+00 : f32
    %41 = vector.broadcast %cst_26 : f32 to vector<8x128xf32>
    %42 = arith.addf %41, %40 : vector<8x128xf32>
    %43 = arith.divf %41, %42 : vector<8x128xf32>
    %44 = arith.mulf %35, %15 : vector<8x128xf32>
    %45 = arith.mulf %29, %37 : vector<8x128xf32>
    %46 = arith.addf %44, %45 : vector<8x128xf32>
    %47 = math.tanh %46 : vector<8x128xf32>
    %48 = arith.mulf %43, %47 : vector<8x128xf32>
    %c8_i32 = arith.constant 8 : i32
    %49 = arith.muli %arg1, %c8_i32 : i32
    %50 = arith.addi %49, %c0_i32_18 : i32
    %51 = vector.broadcast %50 : i32 to vector<8x1xi32>
    %52 = arith.cmpi eq, %13, %51 : vector<8x1xi32>
    %53 = vector.shape_cast %52 : vector<8x1xi1> to vector<8x1xi1>
    %54 = vector.broadcast %53 : vector<8x1xi1> to vector<8x128xi1>
    %55 = arith.select %54, %48, %16 : vector<8x128xi1>, vector<8x128xf32>
    %c1_i32 = arith.constant 1 : i32
    %56 = arith.index_cast %c1_i32 : i32 to index
    %c0_27 = arith.constant 0 : index
    %c0_28 = arith.constant 0 : index
    %57 = vector.load %arg13[%56, %c0_27, %c0_28] : memref<8x8x512xf32, #tpu.memory_space<vmem>>, vector<1x8x512xf32>
    %58 = vector.shape_cast %57 : vector<1x8x512xf32> to vector<8x512xf32>
    %59 = arith.truncf %48 : vector<8x128xf32> to vector<8x128xbf16>
    %c0_29 = arith.constant 0 : index
    %c0_30 = arith.constant 0 : index
    %60 = vector.load %arg5[%c0_29, %c0_30] : memref<128x512xbf16, #tpu.memory_space<vmem>>, vector<128x512xbf16>
    %cst_31 = arith.constant dense<0.000000e+00> : vector<8x512xf32>
    %61 = tpu.matmul %59, %60, %cst_31 {dimension_numbers = #tpu.dot_dimension_numbers<[1], [0], [0], [1], [0, 0, 1, 1], [], []>} : vector<8x128xbf16>, vector<128x512xbf16>, vector<8x512xf32> -> vector<8x512xf32>
    %62 = arith.addf %58, %61 : vector<8x512xf32>
    %63 = vector.extract_strided_slice %62 {offsets = [0, 0], sizes = [8, 128], strides = [1, 1]} : vector<8x512xf32> to vector<8x128xf32>
    %64 = arith.negf %63 : vector<8x128xf32>
    %65 = math.exp %64 : vector<8x128xf32>
    %cst_32 = arith.constant 1.000000e+00 : f32
    %66 = vector.broadcast %cst_32 : f32 to vector<8x128xf32>
    %67 = arith.addf %66, %65 : vector<8x128xf32>
    %68 = arith.divf %66, %67 : vector<8x128xf32>
    %69 = vector.extract_strided_slice %62 {offsets = [0, 128], sizes = [8, 128], strides = [1, 1]} : vector<8x512xf32> to vector<8x128xf32>
    %70 = arith.negf %69 : vector<8x128xf32>
    %71 = math.exp %70 : vector<8x128xf32>
    %cst_33 = arith.constant 1.000000e+00 : f32
    %72 = vector.broadcast %cst_33 : f32 to vector<8x128xf32>
    %73 = arith.addf %72, %71 : vector<8x128xf32>
    %74 = arith.divf %72, %73 : vector<8x128xf32>
    %75 = vector.extract_strided_slice %62 {offsets = [0, 256], sizes = [8, 128], strides = [1, 1]} : vector<8x512xf32> to vector<8x128xf32>
    %76 = math.tanh %75 : vector<8x128xf32>
    %77 = vector.extract_strided_slice %62 {offsets = [0, 384], sizes = [8, 128], strides = [1, 1]} : vector<8x512xf32> to vector<8x128xf32>
    %78 = arith.negf %77 : vector<8x128xf32>
    %79 = math.exp %78 : vector<8x128xf32>
    %cst_34 = arith.constant 1.000000e+00 : f32
    %80 = vector.broadcast %cst_34 : f32 to vector<8x128xf32>
    %81 = arith.addf %80, %79 : vector<8x128xf32>
    %82 = arith.divf %80, %81 : vector<8x128xf32>
    %83 = arith.mulf %74, %46 : vector<8x128xf32>
    %84 = arith.mulf %68, %76 : vector<8x128xf32>
    %85 = arith.addf %83, %84 : vector<8x128xf32>
    %86 = math.tanh %85 : vector<8x128xf32>
    %87 = arith.mulf %82, %86 : vector<8x128xf32>
    %c8_i32_35 = arith.constant 8 : i32
    %88 = arith.muli %arg1, %c8_i32_35 : i32
    %89 = arith.addi %88, %c1_i32 : i32
    %90 = vector.broadcast %89 : i32 to vector<8x1xi32>
    %91 = arith.cmpi eq, %13, %90 : vector<8x1xi32>
    %92 = vector.shape_cast %91 : vector<8x1xi1> to vector<8x1xi1>
    %93 = vector.broadcast %92 : vector<8x1xi1> to vector<8x128xi1>
    %94 = arith.select %93, %87, %55 : vector<8x128xi1>, vector<8x128xf32>
    %c2_i32 = arith.constant 2 : i32
    %95 = arith.index_cast %c2_i32 : i32 to index
    %c0_36 = arith.constant 0 : index
    %c0_37 = arith.constant 0 : index
    %96 = vector.load %arg13[%95, %c0_36, %c0_37] : memref<8x8x512xf32, #tpu.memory_space<vmem>>, vector<1x8x512xf32>
    %97 = vector.shape_cast %96 : vector<1x8x512xf32> to vector<8x512xf32>
    %98 = arith.truncf %87 : vector<8x128xf32> to vector<8x128xbf16>
    %c0_38 = arith.constant 0 : index
    %c0_39 = arith.constant 0 : index
    %99 = vector.load %arg5[%c0_38, %c0_39] : memref<128x512xbf16, #tpu.memory_space<vmem>>, vector<128x512xbf16>
    %cst_40 = arith.constant dense<0.000000e+00> : vector<8x512xf32>
    %100 = tpu.matmul %98, %99, %cst_40 {dimension_numbers = #tpu.dot_dimension_numbers<[1], [0], [0], [1], [0, 0, 1, 1], [], []>} : vector<8x128xbf16>, vector<128x512xbf16>, vector<8x512xf32> -> vector<8x512xf32>
    %101 = arith.addf %97, %100 : vector<8x512xf32>
    %102 = vector.extract_strided_slice %101 {offsets = [0, 0], sizes = [8, 128], strides = [1, 1]} : vector<8x512xf32> to vector<8x128xf32>
    %103 = arith.negf %102 : vector<8x128xf32>
    %104 = math.exp %103 : vector<8x128xf32>
    %cst_41 = arith.constant 1.000000e+00 : f32
    %105 = vector.broadcast %cst_41 : f32 to vector<8x128xf32>
    %106 = arith.addf %105, %104 : vector<8x128xf32>
    %107 = arith.divf %105, %106 : vector<8x128xf32>
    %108 = vector.extract_strided_slice %101 {offsets = [0, 128], sizes = [8, 128], strides = [1, 1]} : vector<8x512xf32> to vector<8x128xf32>
    %109 = arith.negf %108 : vector<8x128xf32>
    %110 = math.exp %109 : vector<8x128xf32>
    %cst_42 = arith.constant 1.000000e+00 : f32
    %111 = vector.broadcast %cst_42 : f32 to vector<8x128xf32>
    %112 = arith.addf %111, %110 : vector<8x128xf32>
    %113 = arith.divf %111, %112 : vector<8x128xf32>
    %114 = vector.extract_strided_slice %101 {offsets = [0, 256], sizes = [8, 128], strides = [1, 1]} : vector<8x512xf32> to vector<8x128xf32>
    %115 = math.tanh %114 : vector<8x128xf32>
    %116 = vector.extract_strided_slice %101 {offsets = [0, 384], sizes = [8, 128], strides = [1, 1]} : vector<8x512xf32> to vector<8x128xf32>
    %117 = arith.negf %116 : vector<8x128xf32>
    %118 = math.exp %117 : vector<8x128xf32>
    %cst_43 = arith.constant 1.000000e+00 : f32
    %119 = vector.broadcast %cst_43 : f32 to vector<8x128xf32>
    %120 = arith.addf %119, %118 : vector<8x128xf32>
    %121 = arith.divf %119, %120 : vector<8x128xf32>
    %122 = arith.mulf %113, %85 : vector<8x128xf32>
    %123 = arith.mulf %107, %115 : vector<8x128xf32>
    %124 = arith.addf %122, %123 : vector<8x128xf32>
    %125 = math.tanh %124 : vector<8x128xf32>
    %126 = arith.mulf %121, %125 : vector<8x128xf32>
    %c8_i32_44 = arith.constant 8 : i32
    %127 = arith.muli %arg1, %c8_i32_44 : i32
    %128 = arith.addi %127, %c2_i32 : i32
    %129 = vector.broadcast %128 : i32 to vector<8x1xi32>
    %130 = arith.cmpi eq, %13, %129 : vector<8x1xi32>
    %131 = vector.shape_cast %130 : vector<8x1xi1> to vector<8x1xi1>
    %132 = vector.broadcast %131 : vector<8x1xi1> to vector<8x128xi1>
    %133 = arith.select %132, %126, %94 : vector<8x128xi1>, vector<8x128xf32>
    %c3_i32 = arith.constant 3 : i32
    %134 = arith.index_cast %c3_i32 : i32 to index
    %c0_45 = arith.constant 0 : index
    %c0_46 = arith.constant 0 : index
    %135 = vector.load %arg13[%134, %c0_45, %c0_46] : memref<8x8x512xf32, #tpu.memory_space<vmem>>, vector<1x8x512xf32>
    %136 = vector.shape_cast %135 : vector<1x8x512xf32> to vector<8x512xf32>
    %137 = arith.truncf %126 : vector<8x128xf32> to vector<8x128xbf16>
    %c0_47 = arith.constant 0 : index
    %c0_48 = arith.constant 0 : index
    %138 = vector.load %arg5[%c0_47, %c0_48] : memref<128x512xbf16, #tpu.memory_space<vmem>>, vector<128x512xbf16>
    %cst_49 = arith.constant dense<0.000000e+00> : vector<8x512xf32>
    %139 = tpu.matmul %137, %138, %cst_49 {dimension_numbers = #tpu.dot_dimension_numbers<[1], [0], [0], [1], [0, 0, 1, 1], [], []>} : vector<8x128xbf16>, vector<128x512xbf16>, vector<8x512xf32> -> vector<8x512xf32>
    %140 = arith.addf %136, %139 : vector<8x512xf32>
    %141 = vector.extract_strided_slice %140 {offsets = [0, 0], sizes = [8, 128], strides = [1, 1]} : vector<8x512xf32> to vector<8x128xf32>
    %142 = arith.negf %141 : vector<8x128xf32>
    %143 = math.exp %142 : vector<8x128xf32>
    %cst_50 = arith.constant 1.000000e+00 : f32
    %144 = vector.broadcast %cst_50 : f32 to vector<8x128xf32>
    %145 = arith.addf %144, %143 : vector<8x128xf32>
    %146 = arith.divf %144, %145 : vector<8x128xf32>
    %147 = vector.extract_strided_slice %140 {offsets = [0, 128], sizes = [8, 128], strides = [1, 1]} : vector<8x512xf32> to vector<8x128xf32>
    %148 = arith.negf %147 : vector<8x128xf32>
    %149 = math.exp %148 : vector<8x128xf32>
    %cst_51 = arith.constant 1.000000e+00 : f32
    %150 = vector.broadcast %cst_51 : f32 to vector<8x128xf32>
    %151 = arith.addf %150, %149 : vector<8x128xf32>
    %152 = arith.divf %150, %151 : vector<8x128xf32>
    %153 = vector.extract_strided_slice %140 {offsets = [0, 256], sizes = [8, 128], strides = [1, 1]} : vector<8x512xf32> to vector<8x128xf32>
    %154 = math.tanh %153 : vector<8x128xf32>
    %155 = vector.extract_strided_slice %140 {offsets = [0, 384], sizes = [8, 128], strides = [1, 1]} : vector<8x512xf32> to vector<8x128xf32>
    %156 = arith.negf %155 : vector<8x128xf32>
    %157 = math.exp %156 : vector<8x128xf32>
    %cst_52 = arith.constant 1.000000e+00 : f32
    %158 = vector.broadcast %cst_52 : f32 to vector<8x128xf32>
    %159 = arith.addf %158, %157 : vector<8x128xf32>
    %160 = arith.divf %158, %159 : vector<8x128xf32>
    %161 = arith.mulf %152, %124 : vector<8x128xf32>
    %162 = arith.mulf %146, %154 : vector<8x128xf32>
    %163 = arith.addf %161, %162 : vector<8x128xf32>
    %164 = math.tanh %163 : vector<8x128xf32>
    %165 = arith.mulf %160, %164 : vector<8x128xf32>
    %c8_i32_53 = arith.constant 8 : i32
    %166 = arith.muli %arg1, %c8_i32_53 : i32
    %167 = arith.addi %166, %c3_i32 : i32
    %168 = vector.broadcast %167 : i32 to vector<8x1xi32>
    %169 = arith.cmpi eq, %13, %168 : vector<8x1xi32>
    %170 = vector.shape_cast %169 : vector<8x1xi1> to vector<8x1xi1>
    %171 = vector.broadcast %170 : vector<8x1xi1> to vector<8x128xi1>
    %172 = arith.select %171, %165, %133 : vector<8x128xi1>, vector<8x128xf32>
    %c4_i32 = arith.constant 4 : i32
    %173 = arith.index_cast %c4_i32 : i32 to index
    %c0_54 = arith.constant 0 : index
    %c0_55 = arith.constant 0 : index
    %174 = vector.load %arg13[%173, %c0_54, %c0_55] : memref<8x8x512xf32, #tpu.memory_space<vmem>>, vector<1x8x512xf32>
    %175 = vector.shape_cast %174 : vector<1x8x512xf32> to vector<8x512xf32>
    %176 = arith.truncf %165 : vector<8x128xf32> to vector<8x128xbf16>
    %c0_56 = arith.constant 0 : index
    %c0_57 = arith.constant 0 : index
    %177 = vector.load %arg5[%c0_56, %c0_57] : memref<128x512xbf16, #tpu.memory_space<vmem>>, vector<128x512xbf16>
    %cst_58 = arith.constant dense<0.000000e+00> : vector<8x512xf32>
    %178 = tpu.matmul %176, %177, %cst_58 {dimension_numbers = #tpu.dot_dimension_numbers<[1], [0], [0], [1], [0, 0, 1, 1], [], []>} : vector<8x128xbf16>, vector<128x512xbf16>, vector<8x512xf32> -> vector<8x512xf32>
    %179 = arith.addf %175, %178 : vector<8x512xf32>
    %180 = vector.extract_strided_slice %179 {offsets = [0, 0], sizes = [8, 128], strides = [1, 1]} : vector<8x512xf32> to vector<8x128xf32>
    %181 = arith.negf %180 : vector<8x128xf32>
    %182 = math.exp %181 : vector<8x128xf32>
    %cst_59 = arith.constant 1.000000e+00 : f32
    %183 = vector.broadcast %cst_59 : f32 to vector<8x128xf32>
    %184 = arith.addf %183, %182 : vector<8x128xf32>
    %185 = arith.divf %183, %184 : vector<8x128xf32>
    %186 = vector.extract_strided_slice %179 {offsets = [0, 128], sizes = [8, 128], strides = [1, 1]} : vector<8x512xf32> to vector<8x128xf32>
    %187 = arith.negf %186 : vector<8x128xf32>
    %188 = math.exp %187 : vector<8x128xf32>
    %cst_60 = arith.constant 1.000000e+00 : f32
    %189 = vector.broadcast %cst_60 : f32 to vector<8x128xf32>
    %190 = arith.addf %189, %188 : vector<8x128xf32>
    %191 = arith.divf %189, %190 : vector<8x128xf32>
    %192 = vector.extract_strided_slice %179 {offsets = [0, 256], sizes = [8, 128], strides = [1, 1]} : vector<8x512xf32> to vector<8x128xf32>
    %193 = math.tanh %192 : vector<8x128xf32>
    %194 = vector.extract_strided_slice %179 {offsets = [0, 384], sizes = [8, 128], strides = [1, 1]} : vector<8x512xf32> to vector<8x128xf32>
    %195 = arith.negf %194 : vector<8x128xf32>
    %196 = math.exp %195 : vector<8x128xf32>
    %cst_61 = arith.constant 1.000000e+00 : f32
    %197 = vector.broadcast %cst_61 : f32 to vector<8x128xf32>
    %198 = arith.addf %197, %196 : vector<8x128xf32>
    %199 = arith.divf %197, %198 : vector<8x128xf32>
    %200 = arith.mulf %191, %163 : vector<8x128xf32>
    %201 = arith.mulf %185, %193 : vector<8x128xf32>
    %202 = arith.addf %200, %201 : vector<8x128xf32>
    %203 = math.tanh %202 : vector<8x128xf32>
    %204 = arith.mulf %199, %203 : vector<8x128xf32>
    %c8_i32_62 = arith.constant 8 : i32
    %205 = arith.muli %arg1, %c8_i32_62 : i32
    %206 = arith.addi %205, %c4_i32 : i32
    %207 = vector.broadcast %206 : i32 to vector<8x1xi32>
    %208 = arith.cmpi eq, %13, %207 : vector<8x1xi32>
    %209 = vector.shape_cast %208 : vector<8x1xi1> to vector<8x1xi1>
    %210 = vector.broadcast %209 : vector<8x1xi1> to vector<8x128xi1>
    %211 = arith.select %210, %204, %172 : vector<8x128xi1>, vector<8x128xf32>
    %c5_i32 = arith.constant 5 : i32
    %212 = arith.index_cast %c5_i32 : i32 to index
    %c0_63 = arith.constant 0 : index
    %c0_64 = arith.constant 0 : index
    %213 = vector.load %arg13[%212, %c0_63, %c0_64] : memref<8x8x512xf32, #tpu.memory_space<vmem>>, vector<1x8x512xf32>
    %214 = vector.shape_cast %213 : vector<1x8x512xf32> to vector<8x512xf32>
    %215 = arith.truncf %204 : vector<8x128xf32> to vector<8x128xbf16>
    %c0_65 = arith.constant 0 : index
    %c0_66 = arith.constant 0 : index
    %216 = vector.load %arg5[%c0_65, %c0_66] : memref<128x512xbf16, #tpu.memory_space<vmem>>, vector<128x512xbf16>
    %cst_67 = arith.constant dense<0.000000e+00> : vector<8x512xf32>
    %217 = tpu.matmul %215, %216, %cst_67 {dimension_numbers = #tpu.dot_dimension_numbers<[1], [0], [0], [1], [0, 0, 1, 1], [], []>} : vector<8x128xbf16>, vector<128x512xbf16>, vector<8x512xf32> -> vector<8x512xf32>
    %218 = arith.addf %214, %217 : vector<8x512xf32>
    %219 = vector.extract_strided_slice %218 {offsets = [0, 0], sizes = [8, 128], strides = [1, 1]} : vector<8x512xf32> to vector<8x128xf32>
    %220 = arith.negf %219 : vector<8x128xf32>
    %221 = math.exp %220 : vector<8x128xf32>
    %cst_68 = arith.constant 1.000000e+00 : f32
    %222 = vector.broadcast %cst_68 : f32 to vector<8x128xf32>
    %223 = arith.addf %222, %221 : vector<8x128xf32>
    %224 = arith.divf %222, %223 : vector<8x128xf32>
    %225 = vector.extract_strided_slice %218 {offsets = [0, 128], sizes = [8, 128], strides = [1, 1]} : vector<8x512xf32> to vector<8x128xf32>
    %226 = arith.negf %225 : vector<8x128xf32>
    %227 = math.exp %226 : vector<8x128xf32>
    %cst_69 = arith.constant 1.000000e+00 : f32
    %228 = vector.broadcast %cst_69 : f32 to vector<8x128xf32>
    %229 = arith.addf %228, %227 : vector<8x128xf32>
    %230 = arith.divf %228, %229 : vector<8x128xf32>
    %231 = vector.extract_strided_slice %218 {offsets = [0, 256], sizes = [8, 128], strides = [1, 1]} : vector<8x512xf32> to vector<8x128xf32>
    %232 = math.tanh %231 : vector<8x128xf32>
    %233 = vector.extract_strided_slice %218 {offsets = [0, 384], sizes = [8, 128], strides = [1, 1]} : vector<8x512xf32> to vector<8x128xf32>
    %234 = arith.negf %233 : vector<8x128xf32>
    %235 = math.exp %234 : vector<8x128xf32>
    %cst_70 = arith.constant 1.000000e+00 : f32
    %236 = vector.broadcast %cst_70 : f32 to vector<8x128xf32>
    %237 = arith.addf %236, %235 : vector<8x128xf32>
    %238 = arith.divf %236, %237 : vector<8x128xf32>
    %239 = arith.mulf %230, %202 : vector<8x128xf32>
    %240 = arith.mulf %224, %232 : vector<8x128xf32>
    %241 = arith.addf %239, %240 : vector<8x128xf32>
    %242 = math.tanh %241 : vector<8x128xf32>
    %243 = arith.mulf %238, %242 : vector<8x128xf32>
    %c8_i32_71 = arith.constant 8 : i32
    %244 = arith.muli %arg1, %c8_i32_71 : i32
    %245 = arith.addi %244, %c5_i32 : i32
    %246 = vector.broadcast %245 : i32 to vector<8x1xi32>
    %247 = arith.cmpi eq, %13, %246 : vector<8x1xi32>
    %248 = vector.shape_cast %247 : vector<8x1xi1> to vector<8x1xi1>
    %249 = vector.broadcast %248 : vector<8x1xi1> to vector<8x128xi1>
    %250 = arith.select %249, %243, %211 : vector<8x128xi1>, vector<8x128xf32>
    %c6_i32 = arith.constant 6 : i32
    %251 = arith.index_cast %c6_i32 : i32 to index
    %c0_72 = arith.constant 0 : index
    %c0_73 = arith.constant 0 : index
    %252 = vector.load %arg13[%251, %c0_72, %c0_73] : memref<8x8x512xf32, #tpu.memory_space<vmem>>, vector<1x8x512xf32>
    %253 = vector.shape_cast %252 : vector<1x8x512xf32> to vector<8x512xf32>
    %254 = arith.truncf %243 : vector<8x128xf32> to vector<8x128xbf16>
    %c0_74 = arith.constant 0 : index
    %c0_75 = arith.constant 0 : index
    %255 = vector.load %arg5[%c0_74, %c0_75] : memref<128x512xbf16, #tpu.memory_space<vmem>>, vector<128x512xbf16>
    %cst_76 = arith.constant dense<0.000000e+00> : vector<8x512xf32>
    %256 = tpu.matmul %254, %255, %cst_76 {dimension_numbers = #tpu.dot_dimension_numbers<[1], [0], [0], [1], [0, 0, 1, 1], [], []>} : vector<8x128xbf16>, vector<128x512xbf16>, vector<8x512xf32> -> vector<8x512xf32>
    %257 = arith.addf %253, %256 : vector<8x512xf32>
    %258 = vector.extract_strided_slice %257 {offsets = [0, 0], sizes = [8, 128], strides = [1, 1]} : vector<8x512xf32> to vector<8x128xf32>
    %259 = arith.negf %258 : vector<8x128xf32>
    %260 = math.exp %259 : vector<8x128xf32>
    %cst_77 = arith.constant 1.000000e+00 : f32
    %261 = vector.broadcast %cst_77 : f32 to vector<8x128xf32>
    %262 = arith.addf %261, %260 : vector<8x128xf32>
    %263 = arith.divf %261, %262 : vector<8x128xf32>
    %264 = vector.extract_strided_slice %257 {offsets = [0, 128], sizes = [8, 128], strides = [1, 1]} : vector<8x512xf32> to vector<8x128xf32>
    %265 = arith.negf %264 : vector<8x128xf32>
    %266 = math.exp %265 : vector<8x128xf32>
    %cst_78 = arith.constant 1.000000e+00 : f32
    %267 = vector.broadcast %cst_78 : f32 to vector<8x128xf32>
    %268 = arith.addf %267, %266 : vector<8x128xf32>
    %269 = arith.divf %267, %268 : vector<8x128xf32>
    %270 = vector.extract_strided_slice %257 {offsets = [0, 256], sizes = [8, 128], strides = [1, 1]} : vector<8x512xf32> to vector<8x128xf32>
    %271 = math.tanh %270 : vector<8x128xf32>
    %272 = vector.extract_strided_slice %257 {offsets = [0, 384], sizes = [8, 128], strides = [1, 1]} : vector<8x512xf32> to vector<8x128xf32>
    %273 = arith.negf %272 : vector<8x128xf32>
    %274 = math.exp %273 : vector<8x128xf32>
    %cst_79 = arith.constant 1.000000e+00 : f32
    %275 = vector.broadcast %cst_79 : f32 to vector<8x128xf32>
    %276 = arith.addf %275, %274 : vector<8x128xf32>
    %277 = arith.divf %275, %276 : vector<8x128xf32>
    %278 = arith.mulf %269, %241 : vector<8x128xf32>
    %279 = arith.mulf %263, %271 : vector<8x128xf32>
    %280 = arith.addf %278, %279 : vector<8x128xf32>
    %281 = math.tanh %280 : vector<8x128xf32>
    %282 = arith.mulf %277, %281 : vector<8x128xf32>
    %c8_i32_80 = arith.constant 8 : i32
    %283 = arith.muli %arg1, %c8_i32_80 : i32
    %284 = arith.addi %283, %c6_i32 : i32
    %285 = vector.broadcast %284 : i32 to vector<8x1xi32>
    %286 = arith.cmpi eq, %13, %285 : vector<8x1xi32>
    %287 = vector.shape_cast %286 : vector<8x1xi1> to vector<8x1xi1>
    %288 = vector.broadcast %287 : vector<8x1xi1> to vector<8x128xi1>
    %289 = arith.select %288, %282, %250 : vector<8x128xi1>, vector<8x128xf32>
    %c7_i32 = arith.constant 7 : i32
    %290 = arith.index_cast %c7_i32 : i32 to index
    %c0_81 = arith.constant 0 : index
    %c0_82 = arith.constant 0 : index
    %291 = vector.load %arg13[%290, %c0_81, %c0_82] : memref<8x8x512xf32, #tpu.memory_space<vmem>>, vector<1x8x512xf32>
    %292 = vector.shape_cast %291 : vector<1x8x512xf32> to vector<8x512xf32>
    %293 = arith.truncf %282 : vector<8x128xf32> to vector<8x128xbf16>
    %c0_83 = arith.constant 0 : index
    %c0_84 = arith.constant 0 : index
    %294 = vector.load %arg5[%c0_83, %c0_84] : memref<128x512xbf16, #tpu.memory_space<vmem>>, vector<128x512xbf16>
    %cst_85 = arith.constant dense<0.000000e+00> : vector<8x512xf32>
    %295 = tpu.matmul %293, %294, %cst_85 {dimension_numbers = #tpu.dot_dimension_numbers<[1], [0], [0], [1], [0, 0, 1, 1], [], []>} : vector<8x128xbf16>, vector<128x512xbf16>, vector<8x512xf32> -> vector<8x512xf32>
    %296 = arith.addf %292, %295 : vector<8x512xf32>
    %297 = vector.extract_strided_slice %296 {offsets = [0, 0], sizes = [8, 128], strides = [1, 1]} : vector<8x512xf32> to vector<8x128xf32>
    %298 = arith.negf %297 : vector<8x128xf32>
    %299 = math.exp %298 : vector<8x128xf32>
    %cst_86 = arith.constant 1.000000e+00 : f32
    %300 = vector.broadcast %cst_86 : f32 to vector<8x128xf32>
    %301 = arith.addf %300, %299 : vector<8x128xf32>
    %302 = arith.divf %300, %301 : vector<8x128xf32>
    %303 = vector.extract_strided_slice %296 {offsets = [0, 128], sizes = [8, 128], strides = [1, 1]} : vector<8x512xf32> to vector<8x128xf32>
    %304 = arith.negf %303 : vector<8x128xf32>
    %305 = math.exp %304 : vector<8x128xf32>
    %cst_87 = arith.constant 1.000000e+00 : f32
    %306 = vector.broadcast %cst_87 : f32 to vector<8x128xf32>
    %307 = arith.addf %306, %305 : vector<8x128xf32>
    %308 = arith.divf %306, %307 : vector<8x128xf32>
    %309 = vector.extract_strided_slice %296 {offsets = [0, 256], sizes = [8, 128], strides = [1, 1]} : vector<8x512xf32> to vector<8x128xf32>
    %310 = math.tanh %309 : vector<8x128xf32>
    %311 = vector.extract_strided_slice %296 {offsets = [0, 384], sizes = [8, 128], strides = [1, 1]} : vector<8x512xf32> to vector<8x128xf32>
    %312 = arith.negf %311 : vector<8x128xf32>
    %313 = math.exp %312 : vector<8x128xf32>
    %cst_88 = arith.constant 1.000000e+00 : f32
    %314 = vector.broadcast %cst_88 : f32 to vector<8x128xf32>
    %315 = arith.addf %314, %313 : vector<8x128xf32>
    %316 = arith.divf %314, %315 : vector<8x128xf32>
    %317 = arith.mulf %308, %280 : vector<8x128xf32>
    %318 = arith.mulf %302, %310 : vector<8x128xf32>
    %319 = arith.addf %317, %318 : vector<8x128xf32>
    %320 = math.tanh %319 : vector<8x128xf32>
    %321 = arith.mulf %316, %320 : vector<8x128xf32>
    %c8_i32_89 = arith.constant 8 : i32
    %322 = arith.muli %arg1, %c8_i32_89 : i32
    %323 = arith.addi %322, %c7_i32 : i32
    %324 = vector.broadcast %323 : i32 to vector<8x1xi32>
    %325 = arith.cmpi eq, %13, %324 : vector<8x1xi32>
    %326 = vector.shape_cast %325 : vector<8x1xi1> to vector<8x1xi1>
    %327 = vector.broadcast %326 : vector<8x1xi1> to vector<8x128xi1>
    %328 = arith.select %327, %321, %289 : vector<8x128xi1>, vector<8x128xf32>
    %c8_i32_90 = arith.constant 8 : i32
    %c0_91 = arith.constant 0 : index
    %c0_92 = arith.constant 0 : index
    %329 = vector.load %arg10[%c0_91, %c0_92] : memref<8x128xf32, #tpu.memory_space<vmem>>, vector<8x128xf32>
    tpu.vector_store %arg10[%c0_91, %c0_92], %321 {strides = array<i32>} : memref<8x128xf32, #tpu.memory_space<vmem>>, vector<8x128xf32>,
    %c0_93 = arith.constant 0 : index
    %c0_94 = arith.constant 0 : index
    %330 = vector.load %arg11[%c0_93, %c0_94] : memref<8x128xf32, #tpu.memory_space<vmem>>, vector<8x128xf32>
    tpu.vector_store %arg11[%c0_93, %c0_94], %319 {strides = array<i32>} : memref<8x128xf32, #tpu.memory_space<vmem>>, vector<8x128xf32>,
    %c0_95 = arith.constant 0 : index
    %c0_96 = arith.constant 0 : index
    %331 = vector.load %arg12[%c0_95, %c0_96] : memref<8x128xf32, #tpu.memory_space<vmem>>, vector<8x128xf32>
    tpu.vector_store %arg12[%c0_95, %c0_96], %328 {strides = array<i32>} : memref<8x128xf32, #tpu.memory_space<vmem>>, vector<8x128xf32>,
    %c0_i32_97 = arith.constant 0 : i32
    %332 = arith.cmpi eq, %arg1, %c0_i32_97 : i32
    %333 = arith.extui %332 : i1 to i32
    %c0_i32_98 = arith.constant 0 : i32
    %334 = arith.cmpi ne, %333, %c0_i32_98 : i32
    scf.if %334 {
      %335 = arith.truncf %328 : vector<8x128xf32> to vector<8x128xbf16>
      %c0_99 = arith.constant 0 : index
      %c0_100 = arith.constant 0 : index
      %336 = vector.load %arg7[%c0_99, %c0_100] : memref<128x1xbf16, #tpu.memory_space<vmem>>, vector<128x1xbf16>
      %cst_101 = arith.constant dense<0.000000e+00> : vector<8x1xf32>
      %337 = tpu.matmul %335, %336, %cst_101 {dimension_numbers = #tpu.dot_dimension_numbers<[1], [0], [0], [1], [0, 0, 1, 1], [], []>} : vector<8x128xbf16>, vector<128x1xbf16>, vector<8x1xf32> -> vector<8x1xf32>
      %c0_102 = arith.constant 0 : index
      %c0_103 = arith.constant 0 : index
      %338 = vector.load %arg8[%c0_102, %c0_103] : memref<1x1xf32, #tpu.memory_space<vmem>>, vector<1x1xf32>
      %339 = vector.broadcast %338 : vector<1x1xf32> to vector<8x1xf32>
      %340 = arith.addf %337, %339 : vector<8x1xf32>
      %341 = arith.negf %340 : vector<8x1xf32>
      %342 = math.exp %341 : vector<8x1xf32>
      %cst_104 = arith.constant 1.000000e+00 : f32
      %343 = vector.broadcast %cst_104 : f32 to vector<8x1xf32>
      %344 = arith.addf %343, %342 : vector<8x1xf32>
      %345 = arith.divf %343, %344 : vector<8x1xf32>
      %c0_105 = arith.constant 0 : index
      %c0_106 = arith.constant 0 : index
      %346 = vector.load %arg9[%c0_105, %c0_106] : memref<8x1xf32, #tpu.memory_space<vmem>>, vector<8x1xf32>
      tpu.vector_store %arg9[%c0_105, %c0_106], %345 {strides = array<i32>} : memref<8x1xf32, #tpu.memory_space<vmem>>, vector<8x1xf32>,
    } else {
    }
    return
  }
  func.func @transform_0(%arg0: i32, %arg1: i32) -> (i32, i32) {
    %c0_i32 = arith.constant 0 : i32
    %c0_i32_0 = arith.constant 0 : i32
    return %arg0, %c0_i32 : i32, i32
  }
  func.func @transform_1(%arg0: i32, %arg1: i32) -> (i32, i32, i32) {
    %c0_i32 = arith.constant 0 : i32
    %c0_i32_0 = arith.constant 0 : i32
    return %arg1, %arg0, %c0_i32 : i32, i32, i32
  }
  func.func @transform_2(%arg0: i32, %arg1: i32) -> (i32, i32) {
    %c0_i32 = arith.constant 0 : i32
    %c0_i32_0 = arith.constant 0 : i32
    %c0_i32_1 = arith.constant 0 : i32
    return %c0_i32, %c0_i32_0 : i32, i32
  }
  func.func @transform_3(%arg0: i32, %arg1: i32) -> (i32, i32) {
    %c0_i32 = arith.constant 0 : i32
    %c0_i32_0 = arith.constant 0 : i32
    %c0_i32_1 = arith.constant 0 : i32
    return %c0_i32, %c0_i32_0 : i32, i32
  }
  func.func @transform_4(%arg0: i32, %arg1: i32) -> (i32, i32) {
    %c0_i32 = arith.constant 0 : i32
    %c0_i32_0 = arith.constant 0 : i32
    %c0_i32_1 = arith.constant 0 : i32
    return %c0_i32, %c0_i32_0 : i32, i32
  }
  func.func @transform_5(%arg0: i32, %arg1: i32) -> (i32, i32) {
    %c0_i32 = arith.constant 0 : i32
    %c0_i32_0 = arith.constant 0 : i32
    %c0_i32_1 = arith.constant 0 : i32
    return %c0_i32, %c0_i32_0 : i32, i32
  }
  func.func @transform_6(%arg0: i32, %arg1: i32) -> (i32, i32) {
    %c0_i32 = arith.constant 0 : i32
    %c0_i32_0 = arith.constant 0 : i32
    %c0_i32_1 = arith.constant 0 : i32
    return %c0_i32, %c0_i32_0 : i32, i32
  }
  func.func @transform_7(%arg0: i32, %arg1: i32) -> (i32, i32) {
    %c0_i32 = arith.constant 0 : i32
    %c0_i32_0 = arith.constant 0 : i32
    return %arg0, %c0_i32 : i32, i32
  }
}

</mosaic_0001>

<llo_original>
// kernel: report_analysis_forward.1
$region0: #{report_analysis_forward.1}
  #allocation0 [shape = 'u32[]', space=smem, size = 0x4, offset = 0x4, fixed_abs, tag = 'smem constant byte address 0x4 - core index']
  #allocation1 [shape = 'u32[144,128]{1,0:T(1,128)}', space=vmem, size = 0x12000, scoped, tag = 'internal scratch']
  #allocation2 [shape = 'f32[8,128]{1,0:T(8,128)}', space=vmem, size = 0x1000, scoped, tag = 'scratch operand']
  #allocation3 [shape = 'f32[8,128]{1,0:T(8,128)}', space=vmem, size = 0x1000, scoped, tag = 'scratch operand']
  #allocation4 [shape = 'f32[8,128]{1,0:T(8,128)}', space=vmem, size = 0x1000, scoped, tag = 'scratch operand']
  #allocation5 [shape = 'f32[8,8,512]{2,1,0:T(8,128)}', space=vmem, size = 0x20000, scoped, tag = 'scratch operand']
  #allocation6 [shape = 'f32[1,1]{1,0:T(1,128)S(1)}', space=vmem, size = 0x200, scoped, tag = 'scoped memory for report_analysis_forward.1']
  %s0 = inlined_call_operand.vmem [shape: s32[8,1], index: 0, kind: input, shape index: {}]
  %s1 = inlined_call_operand.vmem [shape: f32[8,8,32], index: 1, kind: input, shape index: {}]
  %s2 = inlined_call_operand.vmem [shape: bf16[32,512], index: 2, kind: input, shape index: {}]
  %s3 = inlined_call_operand.vmem [shape: bf16[128,512], index: 3, kind: input, shape index: {}]
  %s4 = inlined_call_operand.vmem [shape: f32[1,512], index: 4, kind: input, shape index: {}]
  %s5 = inlined_call_operand.vmem [shape: bf16[128,1], index: 5, kind: input, shape index: {}]
  %s6 = inlined_call_operand.<no memory space> [shape: f32[1,1], index: 6, kind: input, shape index: {}]
  %s7 = inlined_call_operand.vmem [shape: f32[8,1], index: 7, kind: output, shape index: {}]
  %s8 = sld [smem:[#allocation0]]
  $region46: #{report_analysis_forward.1} parent=0
    _
  %s10 = ssub.s32 1, %s8
  %s11 = scalar_select 0, %s10, %s8
  %v12 = vstv %s6
  %13 = vst [vmem:[#allocation6] sm:$0x1] %v12
  // Predicated region
  $region2: #{report_analysis_forward.1} parent=0 // pred_check
    _
  $region3: #{report_analysis_forward.1} parent=0 // pred_check_branch
    %15 = sbr.rel (0) target = $region5
  $region4: #{report_analysis_forward.1} parent=0 // pred_region
    _
  $region5: #{report_analysis_forward.1} parent=0 // pred_fallthru
    _
  // Predicated region
  $region6: #{report_analysis_forward.1} parent=0 // pred_check
    _
  $region7: #{report_analysis_forward.1} parent=0 // pred_check_branch
    %17 = sbr.rel (0) target = $region9
  $region8: #{report_analysis_forward.1} parent=0 // pred_region
    _
  $region9: #{report_analysis_forward.1} parent=0 // pred_fallthru
    _
  // Predicated region
  $region10: #{report_analysis_forward.1} parent=0 // pred_check
    _
  $region11: #{report_analysis_forward.1} parent=0 // pred_check_branch
    %19 = sbr.rel (0) target = $region13
  $region12: #{report_analysis_forward.1} parent=0 // pred_region
    _
  $region13: #{report_analysis_forward.1} parent=0 // pred_fallthru
    _
  // Predicated region
  $region14: #{report_analysis_forward.1} parent=0 // pred_check
    _
  $region15: #{report_analysis_forward.1} parent=0 // pred_check_branch
    %21 = sbr.rel (0) target = $region17
  $region16: #{report_analysis_forward.1} parent=0 // pred_region
    _
  $region17: #{report_analysis_forward.1} parent=0 // pred_fallthru
    _
  // Predicated region
  $region18: #{report_analysis_forward.1} parent=0 // pred_check
    _
  $region19: #{report_analysis_forward.1} parent=0 // pred_check_branch
    %23 = sbr.rel (0) target = $region21
  $region20: #{report_analysis_forward.1} parent=0 // pred_region
    _
  $region21: #{report_analysis_forward.1} parent=0 // pred_fallthru
    _
  // Predicated region
  $region22: #{report_analysis_forward.1} parent=0 // pred_check
    _
  $region23: #{report_analysis_forward.1} parent=0 // pred_check_branch
    %25 = sbr.rel (0) target = $region25
  $region24: #{report_analysis_forward.1} parent=0 // pred_region
    _
  $region25: #{report_analysis_forward.1} parent=0 // pred_fallthru
    _
  // Predicated region
  $region26: #{report_analysis_forward.1} parent=0 // pred_check
    _
  $region27: #{report_analysis_forward.1} parent=0 // pred_check_branch
    %27 = sbr.rel (0) target = $region29
  $region28: #{report_analysis_forward.1} parent=0 // pred_region
    _
  $region29: #{report_analysis_forward.1} parent=0 // pred_fallthru
    _
  %p29 = scmp.eq.s32.totalorder 0, 0
  // Predicated region
  $region30: #{report_analysis_forward.1} parent=0 // pred_check
    %p30 = pneg %p29
  $region31: #{report_analysis_forward.1} parent=0 // pred_check_branch
    %32 = sbr.rel (%p30) target = $region33
  $region32: #{report_analysis_forward.1} parent=0 // pred_region
    %33 = vst [vmem:[#allocation2] sm:$0xff] 0.0
    %34 = vst [vmem:[#allocation3] sm:$0xff] 0.0
    %35 = vst [vmem:[#allocation4] sm:$0xff] 0.0
  $region33: #{report_analysis_forward.1} parent=0 // pred_fallthru
    _
  %v36 = vld [vmem:[%s1] sm:$0xff]
  %v37 = vld [vmem:[%s1 + $0x8] sm:$0xff]
  %v38 = vld [vmem:[%s1 + $0x10] sm:$0xff]
  %v39 = vld [vmem:[%s1 + $0x18] sm:$0xff]
  %v40 = vld [vmem:[%s1 + $0x20] sm:$0xff]
  %v41 = vld [vmem:[%s1 + $0x28] sm:$0xff]
  %v42 = vld [vmem:[%s1 + $0x30] sm:$0xff]
  %v43 = vld [vmem:[%s1 + $0x38] sm:$0xff]
  %v44 = vpack.c.bf16 %v37, %v36
  %v45 = vpack.c.bf16 %v39, %v38
  %v46 = vpack.c.bf16 %v41, %v40
  %v47 = vpack.c.bf16 %v43, %v42
  %v48 = vld [vmem:[%s2] sm:$0xff]
  %v49 = vld [vmem:[%s2 + $0x8] sm:$0xff]
  %v50 = vld [vmem:[%s2 + $0x10] sm:$0xff]
  %v51 = vld [vmem:[%s2 + $0x18] sm:$0xff]
  %v52 = vld [vmem:[%s2 + $0x20] sm:$0xff]
  %v53 = vld [vmem:[%s2 + $0x28] sm:$0xff]
  %v54 = vld [vmem:[%s2 + $0x30] sm:$0xff]
  %v55 = vld [vmem:[%s2 + $0x38] sm:$0xff]
  %v56 = vld [vmem:[%s4] sm:$0xf]
  %v58 = vlaneseq
  %v59 = vshrl.u32 %v58, 7
  %v60 = vsub.s32 0, %v59
  %v61 = vrot.slane %v56, %v60
  %v62 = vlaneseq
  %v63 = vshrl.u32 %v62, 7
  %v64 = vsub.s32 1, %v63
  %v65 = vrot.slane %v56, %v64
  %v66 = vlaneseq
  %v67 = vshrl.u32 %v66, 7
  %v68 = vsub.s32 2, %v67
  %v69 = vrot.slane %v56, %v68
  %v70 = vlaneseq
  %v71 = vshrl.u32 %v70, 7
  %v72 = vsub.s32 3, %v71
  %v73 = vrot.slane %v56, %v72
  %v86 = vunpack.c.l.b16 %v48
  %v87 = vunpack.c.h.b16 %v48
  %v88 = vunpack.c.l.b16 %v49
  %v89 = vunpack.c.h.b16 %v49
  %v90 = vunpack.c.l.b16 %v50
  %v91 = vunpack.c.h.b16 %v50
  %v92 = vunpack.c.l.b16 %v51
  %v93 = vunpack.c.h.b16 %v51
  %v94 = vunpack.c.l.b16 %v52
  %v95 = vunpack.c.h.b16 %v52
  %v96 = vunpack.c.l.b16 %v53
  %v97 = vunpack.c.h.b16 %v53
  %v98 = vunpack.c.l.b16 %v54
  %v99 = vunpack.c.h.b16 %v54
  %v100 = vunpack.c.l.b16 %v55
  %v101 = vunpack.c.h.b16 %v55
  %v102 = vpack.c.b16 %v90, %v86
  %v103 = vpack.c.b16 %v91, %v87
  %v104 = vpack.c.b16 %v92, %v88
  %v105 = vpack.c.b16 %v93, %v89
  %v106 = vpack.c.b16 %v98, %v94
  %v107 = vpack.c.b16 %v99, %v95
  %v108 = vpack.c.b16 %v100, %v96
  %v109 = vpack.c.b16 %v101, %v97
  %vm118 = vcmask 261120
  %v120 = vsel %vm118, %v44, 0
  %v123 = vsel %vm118, %v45, 0
  %v126 = vsel %vm118, %v46, 0
  %v129 = vsel %vm118, %v47, 0
  %131 = vmatprep.subr.bf16.mxu0 0
  %132 = vmatpush1.bf16.msra.mxu0 0
  %133 = vmatprep.subr.bf16.mxu0 0
  %134 = vmatpush1.bf16.msra.mxu0 0
  %135 = vmatprep.subr.bf16.mxu0 0
  %136 = vmatpush1.bf16.msra.mxu0 0
  %137 = vmatprep.subr.bf16.mxu0 0
  %138 = vmatpush1.bf16.msra.mxu0 0
  %139 = vmatprep.subr.bf16.mxu0 0
  %140 = vmatpush1.bf16.msra.mxu0 0
  %141 = vmatprep.subr.bf16.mxu0 0
  %142 = vmatpush1.bf16.msra.mxu0 0
  %143 = vmatprep.subr.bf16.mxu0 %v107
  %144 = vmatpush1.bf16.msra.mxu0 %v106
  %145 = vmatprep.subr.bf16.mxu0 %v103
  %146 = vmatpush1.bf16.msra.mxu0 %v102
  %147 = vmatprep.subr.bf16.mxu0 0
  %148 = vmatpush2.bf16.msra.mxu0 0
  %149 = vmatprep.subr.bf16.mxu0 0
  %150 = vmatpush2.bf16.msra.mxu0 0
  %151 = vmatprep.subr.bf16.mxu0 0
  %152 = vmatpush2.bf16.msra.mxu0 0
  %153 = vmatprep.subr.bf16.mxu0 0
  %154 = vmatpush2.bf16.msra.mxu0 0
  %155 = vmatprep.subr.bf16.mxu0 0
  %156 = vmatpush2.bf16.msra.mxu0 0
  %157 = vmatprep.subr.bf16.mxu0 0
  %158 = vmatpush2.bf16.msra.mxu0 0
  %159 = vmatprep.subr.bf16.mxu0 0
  %160 = vmatpush2.bf16.msra.mxu0 0
  %161 = vmatprep.subr.bf16.mxu0 0
  %162 = vmatpush2.bf16.msra.mxu0 0
  %163 = vmatprep.mubr.bf16.mxu0 0
  %164 = vmatmul.mubr.bf16.gmra.mxu0 %v120
  %v165 = vpop.f32.mrf.mxu0
  %v166 = vadd.f32 %v61, %v165
  %v167 = vpop.f32.mrf.mxu0
  %v168 = vadd.f32 %v65, %v167
  %v169 = vpop.f32.mrf.mxu0
  %v170 = vadd.f32 %v61, %v169
  %v171 = vpop.f32.mrf.mxu0
  %v172 = vadd.f32 %v65, %v171
  %173 = vmatprep.mubr.bf16.mxu0 0
  %174 = vmatmul.mubr.bf16.gmra.mxu0 %v123
  %v175 = vpop.f32.mrf.mxu0
  %v176 = vadd.f32 %v61, %v175
  %v177 = vpop.f32.mrf.mxu0
  %v178 = vadd.f32 %v65, %v177
  %v179 = vpop.f32.mrf.mxu0
  %v180 = vadd.f32 %v61, %v179
  %v181 = vpop.f32.mrf.mxu0
  %v182 = vadd.f32 %v65, %v181
  %183 = vmatprep.mubr.bf16.mxu0 0
  %184 = vmatmul.mubr.bf16.gmra.mxu0 %v126
  %v185 = vpop.f32.mrf.mxu0
  %v186 = vadd.f32 %v61, %v185
  %v187 = vpop.f32.mrf.mxu0
  %v188 = vadd.f32 %v65, %v187
  %v189 = vpop.f32.mrf.mxu0
  %v190 = vadd.f32 %v61, %v189
  %v191 = vpop.f32.mrf.mxu0
  %v192 = vadd.f32 %v65, %v191
  %193 = vmatprep.mubr.bf16.mxu0 0
  %194 = vmatmul.mubr.bf16.gmra.mxu0 %v129
  %v195 = vpop.f32.mrf.mxu0
  %v196 = vadd.f32 %v61, %v195
  %v197 = vpop.f32.mrf.mxu0
  %v198 = vadd.f32 %v65, %v197
  %v199 = vpop.f32.mrf.mxu0
  %v200 = vadd.f32 %v61, %v199
  %v201 = vpop.f32.mrf.mxu0
  %v202 = vadd.f32 %v65, %v201
  %203 = vdwg.mxu0
  %204 = vmatprep.subr.bf16.mxu0 0
  %205 = vmatpush1.bf16.msra.mxu0 0
  %206 = vmatprep.subr.bf16.mxu0 0
  %207 = vmatpush1.bf16.msra.mxu0 0
  %208 = vmatprep.subr.bf16.mxu0 0
  %209 = vmatpush1.bf16.msra.mxu0 0
  %210 = vmatprep.subr.bf16.mxu0 0
  %211 = vmatpush1.bf16.msra.mxu0 0
  %212 = vmatprep.subr.bf16.mxu0 0
  %213 = vmatpush1.bf16.msra.mxu0 0
  %214 = vmatprep.subr.bf16.mxu0 0
  %215 = vmatpush1.bf16.msra.mxu0 0
  %216 = vmatprep.subr.bf16.mxu0 %v109
  %217 = vmatpush1.bf16.msra.mxu0 %v108
  %218 = vmatprep.subr.bf16.mxu0 %v105
  %219 = vmatpush1.bf16.msra.mxu0 %v104
  %220 = vmatprep.subr.bf16.mxu0 0
  %221 = vmatpush2.bf16.msra.mxu0 0
  %222 = vmatprep.subr.bf16.mxu0 0
  %223 = vmatpush2.bf16.msra.mxu0 0
  %224 = vmatprep.subr.bf16.mxu0 0
  %225 = vmatpush2.bf16.msra.mxu0 0
  %226 = vmatprep.subr.bf16.mxu0 0
  %227 = vmatpush2.bf16.msra.mxu0 0
  %228 = vmatprep.subr.bf16.mxu0 0
  %229 = vmatpush2.bf16.msra.mxu0 0
  %230 = vmatprep.subr.bf16.mxu0 0
  %231 = vmatpush2.bf16.msra.mxu0 0
  %232 = vmatprep.subr.bf16.mxu0 0
  %233 = vmatpush2.bf16.msra.mxu0 0
  %234 = vmatprep.subr.bf16.mxu0 0
  %235 = vmatpush2.bf16.msra.mxu0 0
  %236 = vmatprep.mubr.bf16.mxu0 0
  %237 = vmatmul.mubr.bf16.gmra.mxu0 %v120
  %v238 = vpop.f32.mrf.mxu0
  %v239 = vadd.f32 %v69, %v238
  %v240 = vpop.f32.mrf.mxu0
  %v241 = vadd.f32 %v73, %v240
  %v242 = vpop.f32.mrf.mxu0
  %v243 = vadd.f32 %v69, %v242
  %v244 = vpop.f32.mrf.mxu0
  %v245 = vadd.f32 %v73, %v244
  %246 = vmatprep.mubr.bf16.mxu0 0
  %247 = vmatmul.mubr.bf16.gmra.mxu0 %v123
  %v248 = vpop.f32.mrf.mxu0
  %v249 = vadd.f32 %v69, %v248
  %v250 = vpop.f32.mrf.mxu0
  %v251 = vadd.f32 %v73, %v250
  %v252 = vpop.f32.mrf.mxu0
  %v253 = vadd.f32 %v69, %v252
  %v254 = vpop.f32.mrf.mxu0
  %v255 = vadd.f32 %v73, %v254
  %256 = vmatprep.mubr.bf16.mxu0 0
  %257 = vmatmul.mubr.bf16.gmra.mxu0 %v126
  %v258 = vpop.f32.mrf.mxu0
  %v259 = vadd.f32 %v69, %v258
  %v260 = vpop.f32.mrf.mxu0
  %v261 = vadd.f32 %v73, %v260
  %v262 = vpop.f32.mrf.mxu0
  %v263 = vadd.f32 %v69, %v262
  %v264 = vpop.f32.mrf.mxu0
  %v265 = vadd.f32 %v73, %v264
  %266 = vmatprep.mubr.bf16.mxu0 0
  %267 = vmatmul.mubr.bf16.gmra.mxu0 %v129
  %v268 = vpop.f32.mrf.mxu0
  %v269 = vadd.f32 %v69, %v268
  %v270 = vpop.f32.mrf.mxu0
  %v271 = vadd.f32 %v73, %v270
  %v272 = vpop.f32.mrf.mxu0
  %v273 = vadd.f32 %v69, %v272
  %v274 = vpop.f32.mrf.mxu0
  %v275 = vadd.f32 %v73, %v274
  %276 = vdwg.mxu0
  %277 = vst [vmem:[#allocation5] sm:$0xff] %v166
  %278 = vst [vmem:[#allocation5 + $0x8] sm:$0xff] %v168
  %279 = vst [vmem:[#allocation5 + $0x10] sm:$0xff] %v239
  %280 = vst [vmem:[#allocation5 + $0x18] sm:$0xff] %v241
  %281 = vst [vmem:[#allocation5 + $0x20] sm:$0xff] %v170
  %282 = vst [vmem:[#allocation5 + $0x28] sm:$0xff] %v172
  %283 = vst [vmem:[#allocation5 + $0x30] sm:$0xff] %v243
  %284 = vst [vmem:[#allocation5 + $0x38] sm:$0xff] %v245
  %285 = vst [vmem:[#allocation5 + $0x40] sm:$0xff] %v176
  %286 = vst [vmem:[#allocation5 + $0x48] sm:$0xff] %v178
  %287 = vst [vmem:[#allocation5 + $0x50] sm:$0xff] %v249
  %288 = vst [vmem:[#allocation5 + $0x58] sm:$0xff] %v251
  %289 = vst [vmem:[#allocation5 + $0x60] sm:$0xff] %v180
  %290 = vst [vmem:[#allocation5 + $0x68] sm:$0xff] %v182
  %291 = vst [vmem:[#allocation5 + $0x70] sm:$0xff] %v253
  %292 = vst [vmem:[#allocation5 + $0x78] sm:$0xff] %v255
  %293 = vst [vmem:[#allocation5 + $0x80] sm:$0xff] %v186
  %294 = vst [vmem:[#allocation5 + $0x88] sm:$0xff] %v188
  %295 = vst [vmem:[#allocation5 + $0x90] sm:$0xff] %v259
  %296 = vst [vmem:[#allocation5 + $0x98] sm:$0xff] %v261
  %297 = vst [vmem:[#allocation5 + $0xa0] sm:$0xff] %v190
  %298 = vst [vmem:[#allocation5 + $0xa8] sm:$0xff] %v192
  %299 = vst [vmem:[#allocation5 + $0xb0] sm:$0xff] %v263
  %300 = vst [vmem:[#allocation5 + $0xb8] sm:$0xff] %v265
  %301 = vst [vmem:[#allocation5 + $0xc0] sm:$0xff] %v196
  %302 = vst [vmem:[#allocation5 + $0xc8] sm:$0xff] %v198
  %303 = vst [vmem:[#allocation5 + $0xd0] sm:$0xff] %v269
  %304 = vst [vmem:[#allocation5 + $0xd8] sm:$0xff] %v271
  %305 = vst [vmem:[#allocation5 + $0xe0] sm:$0xff] %v200
  %306 = vst [vmem:[#allocation5 + $0xe8] sm:$0xff] %v202
  %307 = vst [vmem:[#allocation5 + $0xf0] sm:$0xff] %v273
  %308 = vst [vmem:[#allocation5 + $0xf8] sm:$0xff] %v275
  %v309 = vld [vmem:[%s0] sm:$0xff]
  %v310 = vld [vmem:[#allocation2] sm:$0xff]
  %v311 = vld [vmem:[#allocation3] sm:$0xff]
  %v312 = vld [vmem:[#allocation4] sm:$0xff]
  %v313 = vld [vmem:[#allocation5] sm:$0xff]
  %v314 = vld [vmem:[#allocation5 + $0x8] sm:$0xff]
  %v315 = vld [vmem:[#allocation5 + $0x10] sm:$0xff]
  %v316 = vld [vmem:[#allocation5 + $0x18] sm:$0xff]
  %v317 = vpack.c.bf16 %v310, %v310
  %v318 = vld [vmem:[%s3] sm:$0xff]
  %v319 = vld [vmem:[%s3 + $0x8] sm:$0xff]
  %v320 = vld [vmem:[%s3 + $0x10] sm:$0xff]
  %v321 = vld [vmem:[%s3 + $0x18] sm:$0xff]
  %v322 = vld [vmem:[%s3 + $0x20] sm:$0xff]
  %v323 = vld [vmem:[%s3 + $0x28] sm:$0xff]
  %v324 = vld [vmem:[%s3 + $0x30] sm:$0xff]
  %v325 = vld [vmem:[%s3 + $0x38] sm:$0xff]
  %v326 = vld [vmem:[%s3 + $0x40] sm:$0xff]
  %v327 = vld [vmem:[%s3 + $0x48] sm:$0xff]
  %v328 = vld [vmem:[%s3 + $0x50] sm:$0xff]
  %v329 = vld [vmem:[%s3 + $0x58] sm:$0xff]
  %v330 = vld [vmem:[%s3 + $0x60] sm:$0xff]
  %v331 = vld [vmem:[%s3 + $0x68] sm:$0xff]
  %v332 = vld [vmem:[%s3 + $0x70] sm:$0xff]
  %v333 = vld [vmem:[%s3 + $0x78] sm:$0xff]
  %v334 = vld [vmem:[%s3 + $0x80] sm:$0xff]
  %v335 = vld [vmem:[%s3 + $0x88] sm:$0xff]
  %v336 = vld [vmem:[%s3 + $0x90] sm:$0xff]
  %v337 = vld [vmem:[%s3 + $0x98] sm:$0xff]
  %v338 = vld [vmem:[%s3 + $0xa0] sm:$0xff]
  %v339 = vld [vmem:[%s3 + $0xa8] sm:$0xff]
  %v340 = vld [vmem:[%s3 + $0xb0] sm:$0xff]
  %v341 = vld [vmem:[%s3 + $0xb8] sm:$0xff]
  %v342 = vld [vmem:[%s3 + $0xc0] sm:$0xff]
  %v343 = vld [vmem:[%s3 + $0xc8] sm:$0xff]
  %v344 = vld [vmem:[%s3 + $0xd0] sm:$0xff]
  %v345 = vld [vmem:[%s3 + $0xd8] sm:$0xff]
  %v346 = vld [vmem:[%s3 + $0xe0] sm:$0xff]
  %v347 = vld [vmem:[%s3 + $0xe8] sm:$0xff]
  %v348 = vld [vmem:[%s3 + $0xf0] sm:$0xff]
  %v349 = vld [vmem:[%s3 + $0xf8] sm:$0xff]
  %v382 = vunpack.c.l.b16 %v318
  %v383 = vunpack.c.h.b16 %v318
  %v384 = vunpack.c.l.b16 %v319
  %v385 = vunpack.c.h.b16 %v319
  %v386 = vunpack.c.l.b16 %v320
  %v387 = vunpack.c.h.b16 %v320
  %v388 = vunpack.c.l.b16 %v321
  %v389 = vunpack.c.h.b16 %v321
  %v390 = vunpack.c.l.b16 %v322
  %v391 = vunpack.c.h.b16 %v322
  %v392 = vunpack.c.l.b16 %v323
  %v393 = vunpack.c.h.b16 %v323
  %v394 = vunpack.c.l.b16 %v324
  %v395 = vunpack.c.h.b16 %v324
  %v396 = vunpack.c.l.b16 %v325
  %v397 = vunpack.c.h.b16 %v325
  %v398 = vunpack.c.l.b16 %v326
  %v399 = vunpack.c.h.b16 %v326
  %v400 = vunpack.c.l.b16 %v327
  %v401 = vunpack.c.h.b16 %v327
  %v402 = vunpack.c.l.b16 %v328
  %v403 = vunpack.c.h.b16 %v328
  %v404 = vunpack.c.l.b16 %v329
  %v405 = vunpack.c.h.b16 %v329
  %v406 = vunpack.c.l.b16 %v330
  %v407 = vunpack.c.h.b16 %v330
  %v408 = vunpack.c.l.b16 %v331
  %v409 = vunpack.c.h.b16 %v331
  %v410 = vunpack.c.l.b16 %v332
  %v411 = vunpack.c.h.b16 %v332
  %v412 = vunpack.c.l.b16 %v333
  %v413 = vunpack.c.h.b16 %v333
  %v414 = vunpack.c.l.b16 %v334
  %v415 = vunpack.c.h.b16 %v334
  %v416 = vunpack.c.l.b16 %v335
  %v417 = vunpack.c.h.b16 %v335
  %v418 = vunpack.c.l.b16 %v336
  %v419 = vunpack.c.h.b16 %v336
  %v420 = vunpack.c.l.b16 %v337
  %v421 = vunpack.c.h.b16 %v337
  %v422 = vunpack.c.l.b16 %v338
  %v423 = vunpack.c.h.b16 %v338
  %v424 = vunpack.c.l.b16 %v339
  %v425 = vunpack.c.h.b16 %v339
  %v426 = vunpack.c.l.b16 %v340
  %v427 = vunpack.c.h.b16 %v340
  %v428 = vunpack.c.l.b16 %v341
  %v429 = vunpack.c.h.b16 %v341
  %v430 = vunpack.c.l.b16 %v342
  %v431 = vunpack.c.h.b16 %v342
  %v432 = vunpack.c.l.b16 %v343
  %v433 = vunpack.c.h.b16 %v343
  %v434 = vunpack.c.l.b16 %v344
  %v435 = vunpack.c.h.b16 %v344
  %v436 = vunpack.c.l.b16 %v345
  %v437 = vunpack.c.h.b16 %v345
  %v438 = vunpack.c.l.b16 %v346
  %v439 = vunpack.c.h.b16 %v346
  %v440 = vunpack.c.l.b16 %v347
  %v441 = vunpack.c.h.b16 %v347
  %v442 = vunpack.c.l.b16 %v348
  %v443 = vunpack.c.h.b16 %v348
  %v444 = vunpack.c.l.b16 %v349
  %v445 = vunpack.c.h.b16 %v349
  %v446 = vpack.c.b16 %v386, %v382
  %v447 = vpack.c.b16 %v387, %v383
  %v448 = vpack.c.b16 %v388, %v384
  %v449 = vpack.c.b16 %v389, %v385
  %v450 = vpack.c.b16 %v394, %v390
  %v451 = vpack.c.b16 %v395, %v391
  %v452 = vpack.c.b16 %v396, %v392
  %v453 = vpack.c.b16 %v397, %v393
  %v454 = vpack.c.b16 %v402, %v398
  %v455 = vpack.c.b16 %v403, %v399
  %v456 = vpack.c.b16 %v404, %v400
  %v457 = vpack.c.b16 %v405, %v401
  %v458 = vpack.c.b16 %v410, %v406
  %v459 = vpack.c.b16 %v411, %v407
  %v460 = vpack.c.b16 %v412, %v408
  %v461 = vpack.c.b16 %v413, %v409
  %v462 = vpack.c.b16 %v418, %v414
  %v463 = vpack.c.b16 %v419, %v415
  %v464 = vpack.c.b16 %v420, %v416
  %v465 = vpack.c.b16 %v421, %v417
  %v466 = vpack.c.b16 %v426, %v422
  %v467 = vpack.c.b16 %v427, %v423
  %v468 = vpack.c.b16 %v428, %v424
  %v469 = vpack.c.b16 %v429, %v425
  %v470 = vpack.c.b16 %v434, %v430
  %v471 = vpack.c.b16 %v435, %v431
  %v472 = vpack.c.b16 %v436, %v432
  %v473 = vpack.c.b16 %v437, %v433
  %v474 = vpack.c.b16 %v442, %v438
  %v475 = vpack.c.b16 %v443, %v439
  %v476 = vpack.c.b16 %v444, %v440
  %v477 = vpack.c.b16 %v445, %v441
  %510 = vmatprep.subr.bf16.mxu0 %v475
  %511 = vmatpush1.bf16.msra.mxu0 %v474
  %512 = vmatprep.subr.bf16.mxu0 %v471
  %513 = vmatpush1.bf16.msra.mxu0 %v470
  %514 = vmatprep.subr.bf16.mxu0 %v467
  %515 = vmatpush1.bf16.msra.mxu0 %v466
  %516 = vmatprep.subr.bf16.mxu0 %v463
  %517 = vmatpush1.bf16.msra.mxu0 %v462
  %518 = vmatprep.subr.bf16.mxu0 %v459
  %519 = vmatpush1.bf16.msra.mxu0 %v458
  %520 = vmatprep.subr.bf16.mxu0 %v455
  %521 = vmatpush1.bf16.msra.mxu0 %v454
  %522 = vmatprep.subr.bf16.mxu0 %v451
  %523 = vmatpush1.bf16.msra.mxu0 %v450
  %524 = vmatprep.subr.bf16.mxu0 %v447
  %525 = vmatpush1.bf16.msra.mxu0 %v446
  %526 = vmatprep.subr.bf16.mxu0 0
  %527 = vmatpush2.bf16.msra.mxu0 0
  %528 = vmatprep.subr.bf16.mxu0 0
  %529 = vmatpush2.bf16.msra.mxu0 0
  %530 = vmatprep.subr.bf16.mxu0 0
  %531 = vmatpush2.bf16.msra.mxu0 0
  %532 = vmatprep.subr.bf16.mxu0 0
  %533 = vmatpush2.bf16.msra.mxu0 0
  %534 = vmatprep.subr.bf16.mxu0 0
  %535 = vmatpush2.bf16.msra.mxu0 0
  %536 = vmatprep.subr.bf16.mxu0 0
  %537 = vmatpush2.bf16.msra.mxu0 0
  %538 = vmatprep.subr.bf16.mxu0 0
  %539 = vmatpush2.bf16.msra.mxu0 0
  %540 = vmatprep.subr.bf16.mxu0 0
  %541 = vmatpush2.bf16.msra.mxu0 0
  %542 = vmatprep.mubr.bf16.mxu0 0
  %543 = vmatmul.mubr.bf16.gmra.mxu0 %v317
  %v544 = vpop.f32.mrf.mxu0
  %v545 = vadd.f32 0.0, %v544
  %v546 = vpop.f32.mrf.mxu0
  %v547 = vadd.f32 0.0, %v546
  %v548 = vpop.f32.mrf.mxu0
  %v549 = vpop.f32.mrf.mxu0
  %550 = vdwg.mxu0
  %551 = vmatprep.subr.bf16.mxu0 %v477
  %552 = vmatpush1.bf16.msra.mxu0 %v476
  %553 = vmatprep.subr.bf16.mxu0 %v473
  %554 = vmatpush1.bf16.msra.mxu0 %v472
  %555 = vmatprep.subr.bf16.mxu0 %v469
  %556 = vmatpush1.bf16.msra.mxu0 %v468
  %557 = vmatprep.subr.bf16.mxu0 %v465
  %558 = vmatpush1.bf16.msra.mxu0 %v464
  %559 = vmatprep.subr.bf16.mxu0 %v461
  %560 = vmatpush1.bf16.msra.mxu0 %v460
  %561 = vmatprep.subr.bf16.mxu0 %v457
  %562 = vmatpush1.bf16.msra.mxu0 %v456
  %563 = vmatprep.subr.bf16.mxu0 %v453
  %564 = vmatpush1.bf16.msra.mxu0 %v452
  %565 = vmatprep.subr.bf16.mxu0 %v449
  %566 = vmatpush1.bf16.msra.mxu0 %v448
  %567 = vmatprep.subr.bf16.mxu0 0
  %568 = vmatpush2.bf16.msra.mxu0 0
  %569 = vmatprep.subr.bf16.mxu0 0
  %570 = vmatpush2.bf16.msra.mxu0 0
  %571 = vmatprep.subr.bf16.mxu0 0
  %572 = vmatpush2.bf16.msra.mxu0 0
  %573 = vmatprep.subr.bf16.mxu0 0
  %574 = vmatpush2.bf16.msra.mxu0 0
  %575 = vmatprep.subr.bf16.mxu0 0
  %576 = vmatpush2.bf16.msra.mxu0 0
  %577 = vmatprep.subr.bf16.mxu0 0
  %578 = vmatpush2.bf16.msra.mxu0 0
  %579 = vmatprep.subr.bf16.mxu0 0
  %580 = vmatpush2.bf16.msra.mxu0 0
  %581 = vmatprep.subr.bf16.mxu0 0
  %582 = vmatpush2.bf16.msra.mxu0 0
  %583 = vmatprep.mubr.bf16.mxu0 0
  %584 = vmatmul.mubr.bf16.gmra.mxu0 %v317
  %v585 = vpop.f32.mrf.mxu0
  %v586 = vadd.f32 0.0, %v585
  %v587 = vpop.f32.mrf.mxu0
  %v588 = vadd.f32 0.0, %v587
  %v589 = vpop.f32.mrf.mxu0
  %v590 = vpop.f32.mrf.mxu0
  %591 = vdwg.mxu0
  %v592 = vadd.f32 %v313, %v545
  %v593 = vadd.f32 %v314, %v547
  %v594 = vadd.f32 %v315, %v586
  %v595 = vadd.f32 %v316, %v588
  %v596 = vxor.u32 %v592, 2147483648
  %v597 = vmul.f32 %v596, 1.442695
  %v598 = vpow.pop %v597
  %v599 = vadd.f32 %v598, 1.0
  %v600 = vrcp.pop %v599
  %v601 = vmul.f32 1.0, %v600
  %v602 = vxor.u32 %v593, 2147483648
  %v603 = vmul.f32 %v602, 1.442695
  %v604 = vpow.pop %v603
  %v605 = vadd.f32 %v604, 1.0
  %v606 = vrcp.pop %v605
  %v607 = vmul.f32 1.0, %v606
  %v608 = vtanh.pop %v594
  %v609 = vxor.u32 %v595, 2147483648
  %v610 = vmul.f32 %v609, 1.442695
  %v611 = vpow.pop %v610
  %v612 = vadd.f32 %v611, 1.0
  %v613 = vrcp.pop %v612
  %v614 = vmul.f32 1.0, %v613
  %v615 = vmul.f32 %v607, %v311
  %v616 = vmul.f32 %v601, %v608
  %v617 = vadd.f32 %v615, %v616
  %v618 = vtanh.pop %v617
  %v619 = vmul.f32 %v614, %v618
  %s620 = smul.u32 0, 8
  %v621 = vstv %s620
  %vm622 = vcmp.eq.s32.totalorder %v309, %v621
  %v623 = vsel %vm622, 1, 0
  %624 = vset.pattern.permute.xlu0 0
  %625 = vperm.xlu0 %624, %v623
  %v626 = vpop.permute.xlu0 %625
  %vm627 = vcmp.eq.s32.totalorder %v626, 1
  %v628 = vsel %vm627, %v619, %v312
  %s629 = scalar_lea.vmem [#allocation5], 32
  %v630 = vld [vmem:[%s629] sm:$0xff]
  %v631 = vld [vmem:[%s629 + $0x8] sm:$0xff]
  %v632 = vld [vmem:[%s629 + $0x10] sm:$0xff]
  %v633 = vld [vmem:[%s629 + $0x18] sm:$0xff]
  %v634 = vpack.c.bf16 %v619, %v619
  %635 = vmatprep.subr.bf16.mxu0 %v475
  %636 = vmatpush1.bf16.msra.mxu0 %v474
  %637 = vmatprep.subr.bf16.mxu0 %v471
  %638 = vmatpush1.bf16.msra.mxu0 %v470
  %639 = vmatprep.subr.bf16.mxu0 %v467
  %640 = vmatpush1.bf16.msra.mxu0 %v466
  %641 = vmatprep.subr.bf16.mxu0 %v463
  %642 = vmatpush1.bf16.msra.mxu0 %v462
  %643 = vmatprep.subr.bf16.mxu0 %v459
  %644 = vmatpush1.bf16.msra.mxu0 %v458
  %645 = vmatprep.subr.bf16.mxu0 %v455
  %646 = vmatpush1.bf16.msra.mxu0 %v454
  %647 = vmatprep.subr.bf16.mxu0 %v451
  %648 = vmatpush1.bf16.msra.mxu0 %v450
  %649 = vmatprep.subr.bf16.mxu0 %v447
  %650 = vmatpush1.bf16.msra.mxu0 %v446
  %651 = vmatprep.subr.bf16.mxu0 0
  %652 = vmatpush2.bf16.msra.mxu0 0
  %653 = vmatprep.subr.bf16.mxu0 0
  %654 = vmatpush2.bf16.msra.mxu0 0
  %655 = vmatprep.subr.bf16.mxu0 0
  %656 = vmatpush2.bf16.msra.mxu0 0
  %657 = vmatprep.subr.bf16.mxu0 0
  %658 = vmatpush2.bf16.msra.mxu0 0
  %659 = vmatprep.subr.bf16.mxu0 0
  %660 = vmatpush2.bf16.msra.mxu0 0
  %661 = vmatprep.subr.bf16.mxu0 0
  %662 = vmatpush2.bf16.msra.mxu0 0
  %663 = vmatprep.subr.bf16.mxu0 0
  %664 = vmatpush2.bf16.msra.mxu0 0
  %665 = vmatprep.subr.bf16.mxu0 0
  %666 = vmatpush2.bf16.msra.mxu0 0
  %667 = vmatprep.mubr.bf16.mxu0 0
  %668 = vmatmul.mubr.bf16.gmra.mxu0 %v634
  %v669 = vpop.f32.mrf.mxu0
  %v670 = vadd.f32 0.0, %v669
  %v671 = vpop.f32.mrf.mxu0
  %v672 = vadd.f32 0.0, %v671
  %v673 = vpop.f32.mrf.mxu0
  %v674 = vpop.f32.mrf.mxu0
  %675 = vdwg.mxu0
  %676 = vmatprep.subr.bf16.mxu0 %v477
  %677 = vmatpush1.bf16.msra.mxu0 %v476
  %678 = vmatprep.subr.bf16.mxu0 %v473
  %679 = vmatpush1.bf16.msra.mxu0 %v472
  %680 = vmatprep.subr.bf16.mxu0 %v469
  %681 = vmatpush1.bf16.msra.mxu0 %v468
  %682 = vmatprep.subr.bf16.mxu0 %v465
  %683 = vmatpush1.bf16.msra.mxu0 %v464
  %684 = vmatprep.subr.bf16.mxu0 %v461
  %685 = vmatpush1.bf16.msra.mxu0 %v460
  %686 = vmatprep.subr.bf16.mxu0 %v457
  %687 = vmatpush1.bf16.msra.mxu0 %v456
  %688 = vmatprep.subr.bf16.mxu0 %v453
  %689 = vmatpush1.bf16.msra.mxu0 %v452
  %690 = vmatprep.subr.bf16.mxu0 %v449
  %691 = vmatpush1.bf16.msra.mxu0 %v448
  %692 = vmatprep.subr.bf16.mxu0 0
  %693 = vmatpush2.bf16.msra.mxu0 0
  %694 = vmatprep.subr.bf16.mxu0 0
  %695 = vmatpush2.bf16.msra.mxu0 0
  %696 = vmatprep.subr.bf16.mxu0 0
  %697 = vmatpush2.bf16.msra.mxu0 0
  %698 = vmatprep.subr.bf16.mxu0 0
  %699 = vmatpush2.bf16.msra.mxu0 0
  %700 = vmatprep.subr.bf16.mxu0 0
  %701 = vmatpush2.bf16.msra.mxu0 0
  %702 = vmatprep.subr.bf16.mxu0 0
  %703 = vmatpush2.bf16.msra.mxu0 0
  %704 = vmatprep.subr.bf16.mxu0 0
  %705 = vmatpush2.bf16.msra.mxu0 0
  %706 = vmatprep.subr.bf16.mxu0 0
  %707 = vmatpush2.bf16.msra.mxu0 0
  %708 = vmatprep.mubr.bf16.mxu0 0
  %709 = vmatmul.mubr.bf16.gmra.mxu0 %v634
  %v710 = vpop.f32.mrf.mxu0
  %v711 = vadd.f32 0.0, %v710
  %v712 = vpop.f32.mrf.mxu0
  %v713 = vadd.f32 0.0, %v712
  %v714 = vpop.f32.mrf.mxu0
  %v715 = vpop.f32.mrf.mxu0
  %716 = vdwg.mxu0
  %v717 = vadd.f32 %v630, %v670
  %v718 = vadd.f32 %v631, %v672
  %v719 = vadd.f32 %v632, %v711
  %v720 = vadd.f32 %v633, %v713
  %v721 = vxor.u32 %v717, 2147483648
  %v722 = vmul.f32 %v721, 1.442695
  %v723 = vpow.pop %v722
  %v724 = vadd.f32 %v723, 1.0
  %v725 = vrcp.pop %v724
  %v726 = vmul.f32 1.0, %v725
  %v727 = vxor.u32 %v718, 2147483648
  %v728 = vmul.f32 %v727, 1.442695
  %v729 = vpow.pop %v728
  %v730 = vadd.f32 %v729, 1.0
  %v731 = vrcp.pop %v730
  %v732 = vmul.f32 1.0, %v731
  %v733 = vtanh.pop %v719
  %v734 = vxor.u32 %v720, 2147483648
  %v735 = vmul.f32 %v734, 1.442695
  %v736 = vpow.pop %v735
  %v737 = vadd.f32 %v736, 1.0
  %v738 = vrcp.pop %v737
  %v739 = vmul.f32 1.0, %v738
  %v740 = vmul.f32 %v732, %v617
  %v741 = vmul.f32 %v726, %v733
  %v742 = vadd.f32 %v740, %v741
  %v743 = vtanh.pop %v742
  %v744 = vmul.f32 %v739, %v743
  %s745 = sadd.s32 %s620, 1
  %v746 = vstv %s745
  %vm747 = vcmp.eq.s32.totalorder %v309, %v746
  %v748 = vsel %vm747, 1, 0
  %749 = vset.pattern.permute.xlu0 0
  %750 = vperm.xlu0 %749, %v748
  %v751 = vpop.permute.xlu0 %750
  %vm752 = vcmp.eq.s32.totalorder %v751, 1
  %v753 = vsel %vm752, %v744, %v628
  %s754 = scalar_lea.vmem [#allocation5], 64
  %v755 = vld [vmem:[%s754] sm:$0xff]
  %v756 = vld [vmem:[%s754 + $0x8] sm:$0xff]
  %v757 = vld [vmem:[%s754 + $0x10] sm:$0xff]
  %v758 = vld [vmem:[%s754 + $0x18] sm:$0xff]
  %v759 = vpack.c.bf16 %v744, %v744
  %760 = vmatprep.subr.bf16.mxu0 %v475
  %761 = vmatpush1.bf16.msra.mxu0 %v474
  %762 = vmatprep.subr.bf16.mxu0 %v471
  %763 = vmatpush1.bf16.msra.mxu0 %v470
  %764 = vmatprep.subr.bf16.mxu0 %v467
  %765 = vmatpush1.bf16.msra.mxu0 %v466
  %766 = vmatprep.subr.bf16.mxu0 %v463
  %767 = vmatpush1.bf16.msra.mxu0 %v462
  %768 = vmatprep.subr.bf16.mxu0 %v459
  %769 = vmatpush1.bf16.msra.mxu0 %v458
  %770 = vmatprep.subr.bf16.mxu0 %v455
  %771 = vmatpush1.bf16.msra.mxu0 %v454
  %772 = vmatprep.subr.bf16.mxu0 %v451
  %773 = vmatpush1.bf16.msra.mxu0 %v450
  %774 = vmatprep.subr.bf16.mxu0 %v447
  %775 = vmatpush1.bf16.msra.mxu0 %v446
  %776 = vmatprep.subr.bf16.mxu0 0
  %777 = vmatpush2.bf16.msra.mxu0 0
  %778 = vmatprep.subr.bf16.mxu0 0
  %779 = vmatpush2.bf16.msra.mxu0 0
  %780 = vmatprep.subr.bf16.mxu0 0
  %781 = vmatpush2.bf16.msra.mxu0 0
  %782 = vmatprep.subr.bf16.mxu0 0
  %783 = vmatpush2.bf16.msra.mxu0 0
  %784 = vmatprep.subr.bf16.mxu0 0
  %785 = vmatpush2.bf16.msra.mxu0 0
  %786 = vmatprep.subr.bf16.mxu0 0
  %787 = vmatpush2.bf16.msra.mxu0 0
  %788 = vmatprep.subr.bf16.mxu0 0
  %789 = vmatpush2.bf16.msra.mxu0 0
  %790 = vmatprep.subr.bf16.mxu0 0
  %791 = vmatpush2.bf16.msra.mxu0 0
  %792 = vmatprep.mubr.bf16.mxu0 0
  %793 = vmatmul.mubr.bf16.gmra.mxu0 %v759
  %v794 = vpop.f32.mrf.mxu0
  %v795 = vadd.f32 0.0, %v794
  %v796 = vpop.f32.mrf.mxu0
  %v797 = vadd.f32 0.0, %v796
  %v798 = vpop.f32.mrf.mxu0
  %v799 = vpop.f32.mrf.mxu0
  %800 = vdwg.mxu0
  %801 = vmatprep.subr.bf16.mxu0 %v477
  %802 = vmatpush1.bf16.msra.mxu0 %v476
  %803 = vmatprep.subr.bf16.mxu0 %v473
  %804 = vmatpush1.bf16.msra.mxu0 %v472
  %805 = vmatprep.subr.bf16.mxu0 %v469
  %806 = vmatpush1.bf16.msra.mxu0 %v468
  %807 = vmatprep.subr.bf16.mxu0 %v465
  %808 = vmatpush1.bf16.msra.mxu0 %v464
  %809 = vmatprep.subr.bf16.mxu0 %v461
  %810 = vmatpush1.bf16.msra.mxu0 %v460
  %811 = vmatprep.subr.bf16.mxu0 %v457
  %812 = vmatpush1.bf16.msra.mxu0 %v456
  %813 = vmatprep.subr.bf16.mxu0 %v453
  %814 = vmatpush1.bf16.msra.mxu0 %v452
  %815 = vmatprep.subr.bf16.mxu0 %v449
  %816 = vmatpush1.bf16.msra.mxu0 %v448
  %817 = vmatprep.subr.bf16.mxu0 0
  %818 = vmatpush2.bf16.msra.mxu0 0
  %819 = vmatprep.subr.bf16.mxu0 0
  %820 = vmatpush2.bf16.msra.mxu0 0
  %821 = vmatprep.subr.bf16.mxu0 0
  %822 = vmatpush2.bf16.msra.mxu0 0
  %823 = vmatprep.subr.bf16.mxu0 0
  %824 = vmatpush2.bf16.msra.mxu0 0
  %825 = vmatprep.subr.bf16.mxu0 0
  %826 = vmatpush2.bf16.msra.mxu0 0
  %827 = vmatprep.subr.bf16.mxu0 0
  %828 = vmatpush2.bf16.msra.mxu0 0
  %829 = vmatprep.subr.bf16.mxu0 0
  %830 = vmatpush2.bf16.msra.mxu0 0
  %831 = vmatprep.subr.bf16.mxu0 0
  %832 = vmatpush2.bf16.msra.mxu0 0
  %833 = vmatprep.mubr.bf16.mxu0 0
  %834 = vmatmul.mubr.bf16.gmra.mxu0 %v759
  %v835 = vpop.f32.mrf.mxu0
  %v836 = vadd.f32 0.0, %v835
  %v837 = vpop.f32.mrf.mxu0
  %v838 = vadd.f32 0.0, %v837
  %v839 = vpop.f32.mrf.mxu0
  %v840 = vpop.f32.mrf.mxu0
  %841 = vdwg.mxu0
  %v842 = vadd.f32 %v755, %v795
  %v843 = vadd.f32 %v756, %v797
  %v844 = vadd.f32 %v757, %v836
  %v845 = vadd.f32 %v758, %v838
  %v846 = vxor.u32 %v842, 2147483648
  %v847 = vmul.f32 %v846, 1.442695
  %v848 = vpow.pop %v847
  %v849 = vadd.f32 %v848, 1.0
  %v850 = vrcp.pop %v849
  %v851 = vmul.f32 1.0, %v850
  %v852 = vxor.u32 %v843, 2147483648
  %v853 = vmul.f32 %v852, 1.442695
  %v854 = vpow.pop %v853
  %v855 = vadd.f32 %v854, 1.0
  %v856 = vrcp.pop %v855
  %v857 = vmul.f32 1.0, %v856
  %v858 = vtanh.pop %v844
  %v859 = vxor.u32 %v845, 2147483648
  %v860 = vmul.f32 %v859, 1.442695
  %v861 = vpow.pop %v860
  %v862 = vadd.f32 %v861, 1.0
  %v863 = vrcp.pop %v862
  %v864 = vmul.f32 1.0, %v863
  %v865 = vmul.f32 %v857, %v742
  %v866 = vmul.f32 %v851, %v858
  %v867 = vadd.f32 %v865, %v866
  %v868 = vtanh.pop %v867
  %v869 = vmul.f32 %v864, %v868
  %s870 = sadd.s32 %s620, 2
  %v871 = vstv %s870
  %vm872 = vcmp.eq.s32.totalorder %v309, %v871
  %v873 = vsel %vm872, 1, 0
  %874 = vset.pattern.permute.xlu0 0
  %875 = vperm.xlu0 %874, %v873
  %v876 = vpop.permute.xlu0 %875
  %vm877 = vcmp.eq.s32.totalorder %v876, 1
  %v878 = vsel %vm877, %v869, %v753
  %s879 = scalar_lea.vmem [#allocation5], 96
  %v880 = vld [vmem:[%s879] sm:$0xff]
  %v881 = vld [vmem:[%s879 + $0x8] sm:$0xff]
  %v882 = vld [vmem:[%s879 + $0x10] sm:$0xff]
  %v883 = vld [vmem:[%s879 + $0x18] sm:$0xff]
  %v884 = vpack.c.bf16 %v869, %v869
  %885 = vmatprep.subr.bf16.mxu0 %v475
  %886 = vmatpush1.bf16.msra.mxu0 %v474
  %887 = vmatprep.subr.bf16.mxu0 %v471
  %888 = vmatpush1.bf16.msra.mxu0 %v470
  %889 = vmatprep.subr.bf16.mxu0 %v467
  %890 = vmatpush1.bf16.msra.mxu0 %v466
  %891 = vmatprep.subr.bf16.mxu0 %v463
  %892 = vmatpush1.bf16.msra.mxu0 %v462
  %893 = vmatprep.subr.bf16.mxu0 %v459
  %894 = vmatpush1.bf16.msra.mxu0 %v458
  %895 = vmatprep.subr.bf16.mxu0 %v455
  %896 = vmatpush1.bf16.msra.mxu0 %v454
  %897 = vmatprep.subr.bf16.mxu0 %v451
  %898 = vmatpush1.bf16.msra.mxu0 %v450
  %899 = vmatprep.subr.bf16.mxu0 %v447
  %900 = vmatpush1.bf16.msra.mxu0 %v446
  %901 = vmatprep.subr.bf16.mxu0 0
  %902 = vmatpush2.bf16.msra.mxu0 0
  %903 = vmatprep.subr.bf16.mxu0 0
  %904 = vmatpush2.bf16.msra.mxu0 0
  %905 = vmatprep.subr.bf16.mxu0 0
  %906 = vmatpush2.bf16.msra.mxu0 0
  %907 = vmatprep.subr.bf16.mxu0 0
  %908 = vmatpush2.bf16.msra.mxu0 0
  %909 = vmatprep.subr.bf16.mxu0 0
  %910 = vmatpush2.bf16.msra.mxu0 0
  %911 = vmatprep.subr.bf16.mxu0 0
  %912 = vmatpush2.bf16.msra.mxu0 0
  %913 = vmatprep.subr.bf16.mxu0 0
  %914 = vmatpush2.bf16.msra.mxu0 0
  %915 = vmatprep.subr.bf16.mxu0 0
  %916 = vmatpush2.bf16.msra.mxu0 0
  %917 = vmatprep.mubr.bf16.mxu0 0
  %918 = vmatmul.mubr.bf16.gmra.mxu0 %v884
  %v919 = vpop.f32.mrf.mxu0
  %v920 = vadd.f32 0.0, %v919
  %v921 = vpop.f32.mrf.mxu0
  %v922 = vadd.f32 0.0, %v921
  %v923 = vpop.f32.mrf.mxu0
  %v924 = vpop.f32.mrf.mxu0
  %925 = vdwg.mxu0
  %926 = vmatprep.subr.bf16.mxu0 %v477
  %927 = vmatpush1.bf16.msra.mxu0 %v476
  %928 = vmatprep.subr.bf16.mxu0 %v473
  %929 = vmatpush1.bf16.msra.mxu0 %v472
  %930 = vmatprep.subr.bf16.mxu0 %v469
  %931 = vmatpush1.bf16.msra.mxu0 %v468
  %932 = vmatprep.subr.bf16.mxu0 %v465
  %933 = vmatpush1.bf16.msra.mxu0 %v464
  %934 = vmatprep.subr.bf16.mxu0 %v461
  %935 = vmatpush1.bf16.msra.mxu0 %v460
  %936 = vmatprep.subr.bf16.mxu0 %v457
  %937 = vmatpush1.bf16.msra.mxu0 %v456
  %938 = vmatprep.subr.bf16.mxu0 %v453
  %939 = vmatpush1.bf16.msra.mxu0 %v452
  %940 = vmatprep.subr.bf16.mxu0 %v449
  %941 = vmatpush1.bf16.msra.mxu0 %v448
  %942 = vmatprep.subr.bf16.mxu0 0
  %943 = vmatpush2.bf16.msra.mxu0 0
  %944 = vmatprep.subr.bf16.mxu0 0
  %945 = vmatpush2.bf16.msra.mxu0 0
  %946 = vmatprep.subr.bf16.mxu0 0
  %947 = vmatpush2.bf16.msra.mxu0 0
  %948 = vmatprep.subr.bf16.mxu0 0
  %949 = vmatpush2.bf16.msra.mxu0 0
  %950 = vmatprep.subr.bf16.mxu0 0
  %951 = vmatpush2.bf16.msra.mxu0 0
  %952 = vmatprep.subr.bf16.mxu0 0
  %953 = vmatpush2.bf16.msra.mxu0 0
  %954 = vmatprep.subr.bf16.mxu0 0
  %955 = vmatpush2.bf16.msra.mxu0 0
  %956 = vmatprep.subr.bf16.mxu0 0
  %957 = vmatpush2.bf16.msra.mxu0 0
  %958 = vmatprep.mubr.bf16.mxu0 0
  %959 = vmatmul.mubr.bf16.gmra.mxu0 %v884
  %v960 = vpop.f32.mrf.mxu0
  %v961 = vadd.f32 0.0, %v960
  %v962 = vpop.f32.mrf.mxu0
  %v963 = vadd.f32 0.0, %v962
  %v964 = vpop.f32.mrf.mxu0
  %v965 = vpop.f32.mrf.mxu0
  %966 = vdwg.mxu0
  %v967 = vadd.f32 %v880, %v920
  %v968 = vadd.f32 %v881, %v922
  %v969 = vadd.f32 %v882, %v961
  %v970 = vadd.f32 %v883, %v963
  %v971 = vxor.u32 %v967, 2147483648
  %v972 = vmul.f32 %v971, 1.442695
  %v973 = vpow.pop %v972
  %v974 = vadd.f32 %v973, 1.0
  %v975 = vrcp.pop %v974
  %v976 = vmul.f32 1.0, %v975
  %v977 = vxor.u32 %v968, 2147483648
  %v978 = vmul.f32 %v977, 1.442695
  %v979 = vpow.pop %v978
  %v980 = vadd.f32 %v979, 1.0
  %v981 = vrcp.pop %v980
  %v982 = vmul.f32 1.0, %v981
  %v983 = vtanh.pop %v969
  %v984 = vxor.u32 %v970, 2147483648
  %v985 = vmul.f32 %v984, 1.442695
  %v986 = vpow.pop %v985
  %v987 = vadd.f32 %v986, 1.0
  %v988 = vrcp.pop %v987
  %v989 = vmul.f32 1.0, %v988
  %v990 = vmul.f32 %v982, %v867
  %v991 = vmul.f32 %v976, %v983
  %v992 = vadd.f32 %v990, %v991
  %v993 = vtanh.pop %v992
  %v994 = vmul.f32 %v989, %v993
  %s995 = sadd.s32 %s620, 3
  %v996 = vstv %s995
  %vm997 = vcmp.eq.s32.totalorder %v309, %v996
  %v998 = vsel %vm997, 1, 0
  %999 = vset.pattern.permute.xlu0 0
  %1000 = vperm.xlu0 %999, %v998
  %v1001 = vpop.permute.xlu0 %1000
  %vm1002 = vcmp.eq.s32.totalorder %v1001, 1
  %v1003 = vsel %vm1002, %v994, %v878
  %s1004 = scalar_lea.vmem [#allocation5], 128
  %v1005 = vld [vmem:[%s1004] sm:$0xff]
  %v1006 = vld [vmem:[%s1004 + $0x8] sm:$0xff]
  %v1007 = vld [vmem:[%s1004 + $0x10] sm:$0xff]
  %v1008 = vld [vmem:[%s1004 + $0x18] sm:$0xff]
  %v1009 = vpack.c.bf16 %v994, %v994
  %1010 = vmatprep.subr.bf16.mxu0 %v475
  %1011 = vmatpush1.bf16.msra.mxu0 %v474
  %1012 = vmatprep.subr.bf16.mxu0 %v471
  %1013 = vmatpush1.bf16.msra.mxu0 %v470
  %1014 = vmatprep.subr.bf16.mxu0 %v467
  %1015 = vmatpush1.bf16.msra.mxu0 %v466
  %1016 = vmatprep.subr.bf16.mxu0 %v463
  %1017 = vmatpush1.bf16.msra.mxu0 %v462
  %1018 = vmatprep.subr.bf16.mxu0 %v459
  %1019 = vmatpush1.bf16.msra.mxu0 %v458
  %1020 = vmatprep.subr.bf16.mxu0 %v455
  %1021 = vmatpush1.bf16.msra.mxu0 %v454
  %1022 = vmatprep.subr.bf16.mxu0 %v451
  %1023 = vmatpush1.bf16.msra.mxu0 %v450
  %1024 = vmatprep.subr.bf16.mxu0 %v447
  %1025 = vmatpush1.bf16.msra.mxu0 %v446
  %1026 = vmatprep.subr.bf16.mxu0 0
  %1027 = vmatpush2.bf16.msra.mxu0 0
  %1028 = vmatprep.subr.bf16.mxu0 0
  %1029 = vmatpush2.bf16.msra.mxu0 0
  %1030 = vmatprep.subr.bf16.mxu0 0
  %1031 = vmatpush2.bf16.msra.mxu0 0
  %1032 = vmatprep.subr.bf16.mxu0 0
  %1033 = vmatpush2.bf16.msra.mxu0 0
  %1034 = vmatprep.subr.bf16.mxu0 0
  %1035 = vmatpush2.bf16.msra.mxu0 0
  %1036 = vmatprep.subr.bf16.mxu0 0
  %1037 = vmatpush2.bf16.msra.mxu0 0
  %1038 = vmatprep.subr.bf16.mxu0 0
  %1039 = vmatpush2.bf16.msra.mxu0 0
  %1040 = vmatprep.subr.bf16.mxu0 0
  %1041 = vmatpush2.bf16.msra.mxu0 0
  %1042 = vmatprep.mubr.bf16.mxu0 0
  %1043 = vmatmul.mubr.bf16.gmra.mxu0 %v1009
  %v1044 = vpop.f32.mrf.mxu0
  %v1045 = vadd.f32 0.0, %v1044
  %v1046 = vpop.f32.mrf.mxu0
  %v1047 = vadd.f32 0.0, %v1046
  %v1048 = vpop.f32.mrf.mxu0
  %v1049 = vpop.f32.mrf.mxu0
  %1050 = vdwg.mxu0
  %1051 = vmatprep.subr.bf16.mxu0 %v477
  %1052 = vmatpush1.bf16.msra.mxu0 %v476
  %1053 = vmatprep.subr.bf16.mxu0 %v473
  %1054 = vmatpush1.bf16.msra.mxu0 %v472
  %1055 = vmatprep.subr.bf16.mxu0 %v469
  %1056 = vmatpush1.bf16.msra.mxu0 %v468
  %1057 = vmatprep.subr.bf16.mxu0 %v465
  %1058 = vmatpush1.bf16.msra.mxu0 %v464
  %1059 = vmatprep.subr.bf16.mxu0 %v461
  %1060 = vmatpush1.bf16.msra.mxu0 %v460
  %1061 = vmatprep.subr.bf16.mxu0 %v457
  %1062 = vmatpush1.bf16.msra.mxu0 %v456
  %1063 = vmatprep.subr.bf16.mxu0 %v453
  %1064 = vmatpush1.bf16.msra.mxu0 %v452
  %1065 = vmatprep.subr.bf16.mxu0 %v449
  %1066 = vmatpush1.bf16.msra.mxu0 %v448
  %1067 = vmatprep.subr.bf16.mxu0 0
  %1068 = vmatpush2.bf16.msra.mxu0 0
  %1069 = vmatprep.subr.bf16.mxu0 0
  %1070 = vmatpush2.bf16.msra.mxu0 0
  %1071 = vmatprep.subr.bf16.mxu0 0
  %1072 = vmatpush2.bf16.msra.mxu0 0
  %1073 = vmatprep.subr.bf16.mxu0 0
  %1074 = vmatpush2.bf16.msra.mxu0 0
  %1075 = vmatprep.subr.bf16.mxu0 0
  %1076 = vmatpush2.bf16.msra.mxu0 0
  %1077 = vmatprep.subr.bf16.mxu0 0
  %1078 = vmatpush2.bf16.msra.mxu0 0
  %1079 = vmatprep.subr.bf16.mxu0 0
  %1080 = vmatpush2.bf16.msra.mxu0 0
  %1081 = vmatprep.subr.bf16.mxu0 0
  %1082 = vmatpush2.bf16.msra.mxu0 0
  %1083 = vmatprep.mubr.bf16.mxu0 0
  %1084 = vmatmul.mubr.bf16.gmra.mxu0 %v1009
  %v1085 = vpop.f32.mrf.mxu0
  %v1086 = vadd.f32 0.0, %v1085
  %v1087 = vpop.f32.mrf.mxu0
  %v1088 = vadd.f32 0.0, %v1087
  %v1089 = vpop.f32.mrf.mxu0
  %v1090 = vpop.f32.mrf.mxu0
  %1091 = vdwg.mxu0
  %v1092 = vadd.f32 %v1005, %v1045
  %v1093 = vadd.f32 %v1006, %v1047
  %v1094 = vadd.f32 %v1007, %v1086
  %v1095 = vadd.f32 %v1008, %v1088
  %v1096 = vxor.u32 %v1092, 2147483648
  %v1097 = vmul.f32 %v1096, 1.442695
  %v1098 = vpow.pop %v1097
  %v1099 = vadd.f32 %v1098, 1.0
  %v1100 = vrcp.pop %v1099
  %v1101 = vmul.f32 1.0, %v1100
  %v1102 = vxor.u32 %v1093, 2147483648
  %v1103 = vmul.f32 %v1102, 1.442695
  %v1104 = vpow.pop %v1103
  %v1105 = vadd.f32 %v1104, 1.0
  %v1106 = vrcp.pop %v1105
  %v1107 = vmul.f32 1.0, %v1106
  %v1108 = vtanh.pop %v1094
  %v1109 = vxor.u32 %v1095, 2147483648
  %v1110 = vmul.f32 %v1109, 1.442695
  %v1111 = vpow.pop %v1110
  %v1112 = vadd.f32 %v1111, 1.0
  %v1113 = vrcp.pop %v1112
  %v1114 = vmul.f32 1.0, %v1113
  %v1115 = vmul.f32 %v1107, %v992
  %v1116 = vmul.f32 %v1101, %v1108
  %v1117 = vadd.f32 %v1115, %v1116
  %v1118 = vtanh.pop %v1117
  %v1119 = vmul.f32 %v1114, %v1118
  %s1120 = sadd.s32 %s620, 4
  %v1121 = vstv %s1120
  %vm1122 = vcmp.eq.s32.totalorder %v309, %v1121
  %v1123 = vsel %vm1122, 1, 0
  %1124 = vset.pattern.permute.xlu0 0
  %1125 = vperm.xlu0 %1124, %v1123
  %v1126 = vpop.permute.xlu0 %1125
  %vm1127 = vcmp.eq.s32.totalorder %v1126, 1
  %v1128 = vsel %vm1127, %v1119, %v1003
  %s1129 = scalar_lea.vmem [#allocation5], 160
  %v1130 = vld [vmem:[%s1129] sm:$0xff]
  %v1131 = vld [vmem:[%s1129 + $0x8] sm:$0xff]
  %v1132 = vld [vmem:[%s1129 + $0x10] sm:$0xff]
  %v1133 = vld [vmem:[%s1129 + $0x18] sm:$0xff]
  %v1134 = vpack.c.bf16 %v1119, %v1119
  %1135 = vmatprep.subr.bf16.mxu0 %v475
  %1136 = vmatpush1.bf16.msra.mxu0 %v474
  %1137 = vmatprep.subr.bf16.mxu0 %v471
  %1138 = vmatpush1.bf16.msra.mxu0 %v470
  %1139 = vmatprep.subr.bf16.mxu0 %v467
  %1140 = vmatpush1.bf16.msra.mxu0 %v466
  %1141 = vmatprep.subr.bf16.mxu0 %v463
  %1142 = vmatpush1.bf16.msra.mxu0 %v462
  %1143 = vmatprep.subr.bf16.mxu0 %v459
  %1144 = vmatpush1.bf16.msra.mxu0 %v458
  %1145 = vmatprep.subr.bf16.mxu0 %v455
  %1146 = vmatpush1.bf16.msra.mxu0 %v454
  %1147 = vmatprep.subr.bf16.mxu0 %v451
  %1148 = vmatpush1.bf16.msra.mxu0 %v450
  %1149 = vmatprep.subr.bf16.mxu0 %v447
  %1150 = vmatpush1.bf16.msra.mxu0 %v446
  %1151 = vmatprep.subr.bf16.mxu0 0
  %1152 = vmatpush2.bf16.msra.mxu0 0
  %1153 = vmatprep.subr.bf16.mxu0 0
  %1154 = vmatpush2.bf16.msra.mxu0 0
  %1155 = vmatprep.subr.bf16.mxu0 0
  %1156 = vmatpush2.bf16.msra.mxu0 0
  %1157 = vmatprep.subr.bf16.mxu0 0
  %1158 = vmatpush2.bf16.msra.mxu0 0
  %1159 = vmatprep.subr.bf16.mxu0 0
  %1160 = vmatpush2.bf16.msra.mxu0 0
  %1161 = vmatprep.subr.bf16.mxu0 0
  %1162 = vmatpush2.bf16.msra.mxu0 0
  %1163 = vmatprep.subr.bf16.mxu0 0
  %1164 = vmatpush2.bf16.msra.mxu0 0
  %1165 = vmatprep.subr.bf16.mxu0 0
  %1166 = vmatpush2.bf16.msra.mxu0 0
  %1167 = vmatprep.mubr.bf16.mxu0 0
  %1168 = vmatmul.mubr.bf16.gmra.mxu0 %v1134
  %v1169 = vpop.f32.mrf.mxu0
  %v1170 = vadd.f32 0.0, %v1169
  %v1171 = vpop.f32.mrf.mxu0
  %v1172 = vadd.f32 0.0, %v1171
  %v1173 = vpop.f32.mrf.mxu0
  %v1174 = vpop.f32.mrf.mxu0
  %1175 = vdwg.mxu0
  %1176 = vmatprep.subr.bf16.mxu0 %v477
  %1177 = vmatpush1.bf16.msra.mxu0 %v476
  %1178 = vmatprep.subr.bf16.mxu0 %v473
  %1179 = vmatpush1.bf16.msra.mxu0 %v472
  %1180 = vmatprep.subr.bf16.mxu0 %v469
  %1181 = vmatpush1.bf16.msra.mxu0 %v468
  %1182 = vmatprep.subr.bf16.mxu0 %v465
  %1183 = vmatpush1.bf16.msra.mxu0 %v464
  %1184 = vmatprep.subr.bf16.mxu0 %v461
  %1185 = vmatpush1.bf16.msra.mxu0 %v460
  %1186 = vmatprep.subr.bf16.mxu0 %v457
  %1187 = vmatpush1.bf16.msra.mxu0 %v456
  %1188 = vmatprep.subr.bf16.mxu0 %v453
  %1189 = vmatpush1.bf16.msra.mxu0 %v452
  %1190 = vmatprep.subr.bf16.mxu0 %v449
  %1191 = vmatpush1.bf16.msra.mxu0 %v448
  %1192 = vmatprep.subr.bf16.mxu0 0
  %1193 = vmatpush2.bf16.msra.mxu0 0
  %1194 = vmatprep.subr.bf16.mxu0 0
  %1195 = vmatpush2.bf16.msra.mxu0 0
  %1196 = vmatprep.subr.bf16.mxu0 0
  %1197 = vmatpush2.bf16.msra.mxu0 0
  %1198 = vmatprep.subr.bf16.mxu0 0
  %1199 = vmatpush2.bf16.msra.mxu0 0
  %1200 = vmatprep.subr.bf16.mxu0 0
  %1201 = vmatpush2.bf16.msra.mxu0 0
  %1202 = vmatprep.subr.bf16.mxu0 0
  %1203 = vmatpush2.bf16.msra.mxu0 0
  %1204 = vmatprep.subr.bf16.mxu0 0
  %1205 = vmatpush2.bf16.msra.mxu0 0
  %1206 = vmatprep.subr.bf16.mxu0 0
  %1207 = vmatpush2.bf16.msra.mxu0 0
  %1208 = vmatprep.mubr.bf16.mxu0 0
  %1209 = vmatmul.mubr.bf16.gmra.mxu0 %v1134
  %v1210 = vpop.f32.mrf.mxu0
  %v1211 = vadd.f32 0.0, %v1210
  %v1212 = vpop.f32.mrf.mxu0
  %v1213 = vadd.f32 0.0, %v1212
  %v1214 = vpop.f32.mrf.mxu0
  %v1215 = vpop.f32.mrf.mxu0
  %1216 = vdwg.mxu0
  %v1217 = vadd.f32 %v1130, %v1170
  %v1218 = vadd.f32 %v1131, %v1172
  %v1219 = vadd.f32 %v1132, %v1211
  %v1220 = vadd.f32 %v1133, %v1213
  %v1221 = vxor.u32 %v1217, 2147483648
  %v1222 = vmul.f32 %v1221, 1.442695
  %v1223 = vpow.pop %v1222
  %v1224 = vadd.f32 %v1223, 1.0
  %v1225 = vrcp.pop %v1224
  %v1226 = vmul.f32 1.0, %v1225
  %v1227 = vxor.u32 %v1218, 2147483648
  %v1228 = vmul.f32 %v1227, 1.442695
  %v1229 = vpow.pop %v1228
  %v1230 = vadd.f32 %v1229, 1.0
  %v1231 = vrcp.pop %v1230
  %v1232 = vmul.f32 1.0, %v1231
  %v1233 = vtanh.pop %v1219
  %v1234 = vxor.u32 %v1220, 2147483648
  %v1235 = vmul.f32 %v1234, 1.442695
  %v1236 = vpow.pop %v1235
  %v1237 = vadd.f32 %v1236, 1.0
  %v1238 = vrcp.pop %v1237
  %v1239 = vmul.f32 1.0, %v1238
  %v1240 = vmul.f32 %v1232, %v1117
  %v1241 = vmul.f32 %v1226, %v1233
  %v1242 = vadd.f32 %v1240, %v1241
  %v1243 = vtanh.pop %v1242
  %v1244 = vmul.f32 %v1239, %v1243
  %s1245 = sadd.s32 %s620, 5
  %v1246 = vstv %s1245
  %vm1247 = vcmp.eq.s32.totalorder %v309, %v1246
  %v1248 = vsel %vm1247, 1, 0
  %1249 = vset.pattern.permute.xlu0 0
  %1250 = vperm.xlu0 %1249, %v1248
  %v1251 = vpop.permute.xlu0 %1250
  %vm1252 = vcmp.eq.s32.totalorder %v1251, 1
  %v1253 = vsel %vm1252, %v1244, %v1128
  %s1254 = scalar_lea.vmem [#allocation5], 192
  %v1255 = vld [vmem:[%s1254] sm:$0xff]
  %v1256 = vld [vmem:[%s1254 + $0x8] sm:$0xff]
  %v1257 = vld [vmem:[%s1254 + $0x10] sm:$0xff]
  %v1258 = vld [vmem:[%s1254 + $0x18] sm:$0xff]
  %v1259 = vpack.c.bf16 %v1244, %v1244
  %1260 = vmatprep.subr.bf16.mxu0 %v475
  %1261 = vmatpush1.bf16.msra.mxu0 %v474
  %1262 = vmatprep.subr.bf16.mxu0 %v471
  %1263 = vmatpush1.bf16.msra.mxu0 %v470
  %1264 = vmatprep.subr.bf16.mxu0 %v467
  %1265 = vmatpush1.bf16.msra.mxu0 %v466
  %1266 = vmatprep.subr.bf16.mxu0 %v463
  %1267 = vmatpush1.bf16.msra.mxu0 %v462
  %1268 = vmatprep.subr.bf16.mxu0 %v459
  %1269 = vmatpush1.bf16.msra.mxu0 %v458
  %1270 = vmatprep.subr.bf16.mxu0 %v455
  %1271 = vmatpush1.bf16.msra.mxu0 %v454
  %1272 = vmatprep.subr.bf16.mxu0 %v451
  %1273 = vmatpush1.bf16.msra.mxu0 %v450
  %1274 = vmatprep.subr.bf16.mxu0 %v447
  %1275 = vmatpush1.bf16.msra.mxu0 %v446
  %1276 = vmatprep.subr.bf16.mxu0 0
  %1277 = vmatpush2.bf16.msra.mxu0 0
  %1278 = vmatprep.subr.bf16.mxu0 0
  %1279 = vmatpush2.bf16.msra.mxu0 0
  %1280 = vmatprep.subr.bf16.mxu0 0
  %1281 = vmatpush2.bf16.msra.mxu0 0
  %1282 = vmatprep.subr.bf16.mxu0 0
  %1283 = vmatpush2.bf16.msra.mxu0 0
  %1284 = vmatprep.subr.bf16.mxu0 0
  %1285 = vmatpush2.bf16.msra.mxu0 0
  %1286 = vmatprep.subr.bf16.mxu0 0
  %1287 = vmatpush2.bf16.msra.mxu0 0
  %1288 = vmatprep.subr.bf16.mxu0 0
  %1289 = vmatpush2.bf16.msra.mxu0 0
  %1290 = vmatprep.subr.bf16.mxu0 0
  %1291 = vmatpush2.bf16.msra.mxu0 0
  %1292 = vmatprep.mubr.bf16.mxu0 0
  %1293 = vmatmul.mubr.bf16.gmra.mxu0 %v1259
  %v1294 = vpop.f32.mrf.mxu0
  %v1295 = vadd.f32 0.0, %v1294
  %v1296 = vpop.f32.mrf.mxu0
  %v1297 = vadd.f32 0.0, %v1296
  %v1298 = vpop.f32.mrf.mxu0
  %v1299 = vpop.f32.mrf.mxu0
  %1300 = vdwg.mxu0
  %1301 = vmatprep.subr.bf16.mxu0 %v477
  %1302 = vmatpush1.bf16.msra.mxu0 %v476
  %1303 = vmatprep.subr.bf16.mxu0 %v473
  %1304 = vmatpush1.bf16.msra.mxu0 %v472
  %1305 = vmatprep.subr.bf16.mxu0 %v469
  %1306 = vmatpush1.bf16.msra.mxu0 %v468
  %1307 = vmatprep.subr.bf16.mxu0 %v465
  %1308 = vmatpush1.bf16.msra.mxu0 %v464
  %1309 = vmatprep.subr.bf16.mxu0 %v461
  %1310 = vmatpush1.bf16.msra.mxu0 %v460
  %1311 = vmatprep.subr.bf16.mxu0 %v457
  %1312 = vmatpush1.bf16.msra.mxu0 %v456
  %1313 = vmatprep.subr.bf16.mxu0 %v453
  %1314 = vmatpush1.bf16.msra.mxu0 %v452
  %1315 = vmatprep.subr.bf16.mxu0 %v449
  %1316 = vmatpush1.bf16.msra.mxu0 %v448
  %1317 = vmatprep.subr.bf16.mxu0 0
  %1318 = vmatpush2.bf16.msra.mxu0 0
  %1319 = vmatprep.subr.bf16.mxu0 0
  %1320 = vmatpush2.bf16.msra.mxu0 0
  %1321 = vmatprep.subr.bf16.mxu0 0
  %1322 = vmatpush2.bf16.msra.mxu0 0
  %1323 = vmatprep.subr.bf16.mxu0 0
  %1324 = vmatpush2.bf16.msra.mxu0 0
  %1325 = vmatprep.subr.bf16.mxu0 0
  %1326 = vmatpush2.bf16.msra.mxu0 0
  %1327 = vmatprep.subr.bf16.mxu0 0
  %1328 = vmatpush2.bf16.msra.mxu0 0
  %1329 = vmatprep.subr.bf16.mxu0 0
  %1330 = vmatpush2.bf16.msra.mxu0 0
  %1331 = vmatprep.subr.bf16.mxu0 0
  %1332 = vmatpush2.bf16.msra.mxu0 0
  %1333 = vmatprep.mubr.bf16.mxu0 0
  %1334 = vmatmul.mubr.bf16.gmra.mxu0 %v1259
  %v1335 = vpop.f32.mrf.mxu0
  %v1336 = vadd.f32 0.0, %v1335
  %v1337 = vpop.f32.mrf.mxu0
  %v1338 = vadd.f32 0.0, %v1337
  %v1339 = vpop.f32.mrf.mxu0
  %v1340 = vpop.f32.mrf.mxu0
  %1341 = vdwg.mxu0
  %v1342 = vadd.f32 %v1255, %v1295
  %v1343 = vadd.f32 %v1256, %v1297
  %v1344 = vadd.f32 %v1257, %v1336
  %v1345 = vadd.f32 %v1258, %v1338
  %v1346 = vxor.u32 %v1342, 2147483648
  %v1347 = vmul.f32 %v1346, 1.442695
  %v1348 = vpow.pop %v1347
  %v1349 = vadd.f32 %v1348, 1.0
  %v1350 = vrcp.pop %v1349
  %v1351 = vmul.f32 1.0, %v1350
  %v1352 = vxor.u32 %v1343, 2147483648
  %v1353 = vmul.f32 %v1352, 1.442695
  %v1354 = vpow.pop %v1353
  %v1355 = vadd.f32 %v1354, 1.0
  %v1356 = vrcp.pop %v1355
  %v1357 = vmul.f32 1.0, %v1356
  %v1358 = vtanh.pop %v1344
  %v1359 = vxor.u32 %v1345, 2147483648
  %v1360 = vmul.f32 %v1359, 1.442695
  %v1361 = vpow.pop %v1360
  %v1362 = vadd.f32 %v1361, 1.0
  %v1363 = vrcp.pop %v1362
  %v1364 = vmul.f32 1.0, %v1363
  %v1365 = vmul.f32 %v1357, %v1242
  %v1366 = vmul.f32 %v1351, %v1358
  %v1367 = vadd.f32 %v1365, %v1366
  %v1368 = vtanh.pop %v1367
  %v1369 = vmul.f32 %v1364, %v1368
  %s1370 = sadd.s32 %s620, 6
  %v1371 = vstv %s1370
  %vm1372 = vcmp.eq.s32.totalorder %v309, %v1371
  %v1373 = vsel %vm1372, 1, 0
  %1374 = vset.pattern.permute.xlu0 0
  %1375 = vperm.xlu0 %1374, %v1373
  %v1376 = vpop.permute.xlu0 %1375
  %vm1377 = vcmp.eq.s32.totalorder %v1376, 1
  %v1378 = vsel %vm1377, %v1369, %v1253
  %s1379 = scalar_lea.vmem [#allocation5], 224
  %v1380 = vld [vmem:[%s1379] sm:$0xff]
  %v1381 = vld [vmem:[%s1379 + $0x8] sm:$0xff]
  %v1382 = vld [vmem:[%s1379 + $0x10] sm:$0xff]
  %v1383 = vld [vmem:[%s1379 + $0x18] sm:$0xff]
  %v1384 = vpack.c.bf16 %v1369, %v1369
  %1385 = vmatprep.subr.bf16.mxu0 %v475
  %1386 = vmatpush1.bf16.msra.mxu0 %v474
  %1387 = vmatprep.subr.bf16.mxu0 %v471
  %1388 = vmatpush1.bf16.msra.mxu0 %v470
  %1389 = vmatprep.subr.bf16.mxu0 %v467
  %1390 = vmatpush1.bf16.msra.mxu0 %v466
  %1391 = vmatprep.subr.bf16.mxu0 %v463
  %1392 = vmatpush1.bf16.msra.mxu0 %v462
  %1393 = vmatprep.subr.bf16.mxu0 %v459
  %1394 = vmatpush1.bf16.msra.mxu0 %v458
  %1395 = vmatprep.subr.bf16.mxu0 %v455
  %1396 = vmatpush1.bf16.msra.mxu0 %v454
  %1397 = vmatprep.subr.bf16.mxu0 %v451
  %1398 = vmatpush1.bf16.msra.mxu0 %v450
  %1399 = vmatprep.subr.bf16.mxu0 %v447
  %1400 = vmatpush1.bf16.msra.mxu0 %v446
  %1401 = vmatprep.subr.bf16.mxu0 0
  %1402 = vmatpush2.bf16.msra.mxu0 0
  %1403 = vmatprep.subr.bf16.mxu0 0
  %1404 = vmatpush2.bf16.msra.mxu0 0
  %1405 = vmatprep.subr.bf16.mxu0 0
  %1406 = vmatpush2.bf16.msra.mxu0 0
  %1407 = vmatprep.subr.bf16.mxu0 0
  %1408 = vmatpush2.bf16.msra.mxu0 0
  %1409 = vmatprep.subr.bf16.mxu0 0
  %1410 = vmatpush2.bf16.msra.mxu0 0
  %1411 = vmatprep.subr.bf16.mxu0 0
  %1412 = vmatpush2.bf16.msra.mxu0 0
  %1413 = vmatprep.subr.bf16.mxu0 0
  %1414 = vmatpush2.bf16.msra.mxu0 0
  %1415 = vmatprep.subr.bf16.mxu0 0
  %1416 = vmatpush2.bf16.msra.mxu0 0
  %1417 = vmatprep.mubr.bf16.mxu0 0
  %1418 = vmatmul.mubr.bf16.gmra.mxu0 %v1384
  %v1419 = vpop.f32.mrf.mxu0
  %v1420 = vadd.f32 0.0, %v1419
  %v1421 = vpop.f32.mrf.mxu0
  %v1422 = vadd.f32 0.0, %v1421
  %v1423 = vpop.f32.mrf.mxu0
  %v1424 = vpop.f32.mrf.mxu0
  %1425 = vdwg.mxu0
  %1426 = vmatprep.subr.bf16.mxu0 %v477
  %1427 = vmatpush1.bf16.msra.mxu0 %v476
  %1428 = vmatprep.subr.bf16.mxu0 %v473
  %1429 = vmatpush1.bf16.msra.mxu0 %v472
  %1430 = vmatprep.subr.bf16.mxu0 %v469
  %1431 = vmatpush1.bf16.msra.mxu0 %v468
  %1432 = vmatprep.subr.bf16.mxu0 %v465
  %1433 = vmatpush1.bf16.msra.mxu0 %v464
  %1434 = vmatprep.subr.bf16.mxu0 %v461
  %1435 = vmatpush1.bf16.msra.mxu0 %v460
  %1436 = vmatprep.subr.bf16.mxu0 %v457
  %1437 = vmatpush1.bf16.msra.mxu0 %v456
  %1438 = vmatprep.subr.bf16.mxu0 %v453
  %1439 = vmatpush1.bf16.msra.mxu0 %v452
  %1440 = vmatprep.subr.bf16.mxu0 %v449
  %1441 = vmatpush1.bf16.msra.mxu0 %v448
  %1442 = vmatprep.subr.bf16.mxu0 0
  %1443 = vmatpush2.bf16.msra.mxu0 0
  %1444 = vmatprep.subr.bf16.mxu0 0
  %1445 = vmatpush2.bf16.msra.mxu0 0
  %1446 = vmatprep.subr.bf16.mxu0 0
  %1447 = vmatpush2.bf16.msra.mxu0 0
  %1448 = vmatprep.subr.bf16.mxu0 0
  %1449 = vmatpush2.bf16.msra.mxu0 0
  %1450 = vmatprep.subr.bf16.mxu0 0
  %1451 = vmatpush2.bf16.msra.mxu0 0
  %1452 = vmatprep.subr.bf16.mxu0 0
  %1453 = vmatpush2.bf16.msra.mxu0 0
  %1454 = vmatprep.subr.bf16.mxu0 0
  %1455 = vmatpush2.bf16.msra.mxu0 0
  %1456 = vmatprep.subr.bf16.mxu0 0
  %1457 = vmatpush2.bf16.msra.mxu0 0
  %1458 = vmatprep.mubr.bf16.mxu0 0
  %1459 = vmatmul.mubr.bf16.gmra.mxu0 %v1384
  %v1460 = vpop.f32.mrf.mxu0
  %v1461 = vadd.f32 0.0, %v1460
  %v1462 = vpop.f32.mrf.mxu0
  %v1463 = vadd.f32 0.0, %v1462
  %v1464 = vpop.f32.mrf.mxu0
  %v1465 = vpop.f32.mrf.mxu0
  %1466 = vdwg.mxu0
  %v1467 = vadd.f32 %v1380, %v1420
  %v1468 = vadd.f32 %v1381, %v1422
  %v1469 = vadd.f32 %v1382, %v1461
  %v1470 = vadd.f32 %v1383, %v1463
  %v1471 = vxor.u32 %v1467, 2147483648
  %v1472 = vmul.f32 %v1471, 1.442695
  %v1473 = vpow.pop %v1472
  %v1474 = vadd.f32 %v1473, 1.0
  %v1475 = vrcp.pop %v1474
  %v1476 = vmul.f32 1.0, %v1475
  %v1477 = vxor.u32 %v1468, 2147483648
  %v1478 = vmul.f32 %v1477, 1.442695
  %v1479 = vpow.pop %v1478
  %v1480 = vadd.f32 %v1479, 1.0
  %v1481 = vrcp.pop %v1480
  %v1482 = vmul.f32 1.0, %v1481
  %v1483 = vtanh.pop %v1469
  %v1484 = vxor.u32 %v1470, 2147483648
  %v1485 = vmul.f32 %v1484, 1.442695
  %v1486 = vpow.pop %v1485
  %v1487 = vadd.f32 %v1486, 1.0
  %v1488 = vrcp.pop %v1487
  %v1489 = vmul.f32 1.0, %v1488
  %v1490 = vmul.f32 %v1482, %v1367
  %v1491 = vmul.f32 %v1476, %v1483
  %v1492 = vadd.f32 %v1490, %v1491
  %v1493 = vtanh.pop %v1492
  %v1494 = vmul.f32 %v1489, %v1493
  %s1495 = sadd.s32 %s620, 7
  %v1496 = vstv %s1495
  %vm1497 = vcmp.eq.s32.totalorder %v309, %v1496
  %v1498 = vsel %vm1497, 1, 0
  %1499 = vset.pattern.permute.xlu0 0
  %1500 = vperm.xlu0 %1499, %v1498
  %v1501 = vpop.permute.xlu0 %1500
  %vm1502 = vcmp.eq.s32.totalorder %v1501, 1
  %v1503 = vsel %vm1502, %v1494, %v1378
  %1504 = vst [vmem:[#allocation2] sm:$0xff] %v1494
  %1505 = vst [vmem:[#allocation3] sm:$0xff] %v1492
  %1506 = vst [vmem:[#allocation4] sm:$0xff] %v1503
  // Predicated region
  $region34: #{report_analysis_forward.1} parent=0 // pred_check
    %p1507 = pneg %p29
  $region35: #{report_analysis_forward.1} parent=0 // pred_check_branch
    %1509 = sbr.rel (%p1507) target = $region37
  $region36: #{report_analysis_forward.1} parent=0 // pred_region
    %v1510 = vpack.c.bf16 %v1503, %v1503
    %v1511 = vld [vmem:[%s5] sm:$0xf]
    %v1512 = vld [vmem:[%s5 + $0x4] sm:$0xf]
    %v1513 = vld [vmem:[%s5 + $0x8] sm:$0xf]
    %v1514 = vld [vmem:[%s5 + $0xc] sm:$0xf]
    %v1515 = vld [vmem:[%s5 + $0x10] sm:$0xf]
    %v1516 = vld [vmem:[%s5 + $0x14] sm:$0xf]
    %v1517 = vld [vmem:[%s5 + $0x18] sm:$0xf]
    %v1518 = vld [vmem:[%s5 + $0x1c] sm:$0xf]
    %v1519 = vld [vmem:[%s5 + $0x20] sm:$0xf]
    %v1520 = vld [vmem:[%s5 + $0x24] sm:$0xf]
    %v1521 = vld [vmem:[%s5 + $0x28] sm:$0xf]
    %v1522 = vld [vmem:[%s5 + $0x2c] sm:$0xf]
    %v1523 = vld [vmem:[%s5 + $0x30] sm:$0xf]
    %v1524 = vld [vmem:[%s5 + $0x34] sm:$0xf]
    %v1525 = vld [vmem:[%s5 + $0x38] sm:$0xf]
    %v1526 = vld [vmem:[%s5 + $0x3c] sm:$0xf]
    %v1527 = vld [vmem:[#allocation6] sm:$0x1]
    %v1529 = vlaneseq
    %v1530 = vshrl.u32 %v1529, 7
    %v1531 = vsub.s32 0, %v1530
    %v1532 = vrot.slane %v1527, %v1531
    %v1550 = vunpack.c.l.b16 %v1511
    %v1551 = vunpack.c.l.b16 %v1512
    %v1552 = vunpack.c.l.b16 %v1513
    %v1553 = vunpack.c.l.b16 %v1514
    %v1554 = vunpack.c.l.b16 %v1515
    %v1555 = vunpack.c.l.b16 %v1516
    %v1556 = vunpack.c.l.b16 %v1517
    %v1557 = vunpack.c.l.b16 %v1518
    %v1558 = vunpack.c.l.b16 %v1519
    %v1559 = vunpack.c.l.b16 %v1520
    %v1560 = vunpack.c.l.b16 %v1521
    %v1561 = vunpack.c.l.b16 %v1522
    %v1562 = vunpack.c.l.b16 %v1523
    %v1563 = vunpack.c.l.b16 %v1524
    %v1564 = vunpack.c.l.b16 %v1525
    %v1565 = vunpack.c.l.b16 %v1526
    %v1566 = vpack.c.b16 %v1551, %v1550
    %v1567 = vpack.c.b16 %v1553, %v1552
    %v1568 = vpack.c.b16 %v1555, %v1554
    %v1569 = vpack.c.b16 %v1557, %v1556
    %v1570 = vpack.c.b16 %v1559, %v1558
    %v1571 = vpack.c.b16 %v1561, %v1560
    %v1572 = vpack.c.b16 %v1563, %v1562
    %v1573 = vpack.c.b16 %v1565, %v1564
    %1582 = vmatprep.subr.bf16.mxu0 0
    %1583 = vmatpush1.bf16.msra.mxu0 %v1573
    %1584 = vmatprep.subr.bf16.mxu0 0
    %1585 = vmatpush1.bf16.msra.mxu0 %v1572
    %1586 = vmatprep.subr.bf16.mxu0 0
    %1587 = vmatpush1.bf16.msra.mxu0 %v1571
    %1588 = vmatprep.subr.bf16.mxu0 0
    %1589 = vmatpush1.bf16.msra.mxu0 %v1570
    %1590 = vmatprep.subr.bf16.mxu0 0
    %1591 = vmatpush1.bf16.msra.mxu0 %v1569
    %1592 = vmatprep.subr.bf16.mxu0 0
    %1593 = vmatpush1.bf16.msra.mxu0 %v1568
    %1594 = vmatprep.subr.bf16.mxu0 0
    %1595 = vmatpush1.bf16.msra.mxu0 %v1567
    %1596 = vmatprep.subr.bf16.mxu0 0
    %1597 = vmatpush1.bf16.msra.mxu0 %v1566
    %1598 = vmatprep.subr.bf16.mxu0 0
    %1599 = vmatpush2.bf16.msra.mxu0 0
    %1600 = vmatprep.subr.bf16.mxu0 0
    %1601 = vmatpush2.bf16.msra.mxu0 0
    %1602 = vmatprep.subr.bf16.mxu0 0
    %1603 = vmatpush2.bf16.msra.mxu0 0
    %1604 = vmatprep.subr.bf16.mxu0 0
    %1605 = vmatpush2.bf16.msra.mxu0 0
    %1606 = vmatprep.subr.bf16.mxu0 0
    %1607 = vmatpush2.bf16.msra.mxu0 0
    %1608 = vmatprep.subr.bf16.mxu0 0
    %1609 = vmatpush2.bf16.msra.mxu0 0
    %1610 = vmatprep.subr.bf16.mxu0 0
    %1611 = vmatpush2.bf16.msra.mxu0 0
    %1612 = vmatprep.subr.bf16.mxu0 0
    %1613 = vmatpush2.bf16.msra.mxu0 0
    %1614 = vmatprep.mubr.bf16.mxu0 0
    %1615 = vmatmul.mubr.bf16.gmra.mxu0 %v1510
    %v1616 = vpop.f32.mrf.mxu0
    %v1617 = vadd.f32 %v1532, %v1616
    %v1618 = vpop.f32.mrf.mxu0
    %v1619 = vpop.f32.mrf.mxu0
    %v1620 = vpop.f32.mrf.mxu0
    %1621 = vdwg.mxu0
    %v1622 = vxor.u32 %v1617, 2147483648
    %v1623 = vmul.f32 %v1622, 1.442695
    %v1624 = vpow.pop %v1623
    %v1625 = vadd.f32 %v1624, 1.0
    %v1626 = vrcp.pop %v1625
    %v1627 = vmul.f32 1.0, %v1626
    %vm1628 = vcmask 7168
    %1629 = vst.msk [vmem:[%s7] sm:$0xff] %vm1628, %v1627
  $region37: #{report_analysis_forward.1} parent=0 // pred_fallthru
    _
  // Predicated region
  $region38: #{report_analysis_forward.1} parent=0 // pred_check
    _
  $region39: #{report_analysis_forward.1} parent=0 // pred_check_branch
    %1631 = sbr.rel (0) target = $region41
  $region40: #{report_analysis_forward.1} parent=0 // pred_region
    _
  $region41: #{report_analysis_forward.1} parent=0 // pred_fallthru
    _
  // Predicated region
  $region42: #{report_analysis_forward.1} parent=0 // pred_check
    _
  $region43: #{report_analysis_forward.1} parent=0 // pred_check_branch
    %1633 = sbr.rel (0) target = $region45
  $region44: #{report_analysis_forward.1} parent=0 // pred_region
    _
  $region45: #{report_analysis_forward.1} parent=0 // pred_fallthru
    _

</llo_original>
